<compile_context>
chip_gen: v6e
topology: v6e:2x2x1
jax: 0.10.0
libtpu: 0.0.40
codegen_flags: <defaults>
</compile_context>

<pallas_src>
import math
import functools

import jax
import jax.numpy as jnp
from jax.experimental import pallas as pl
from jax.experimental.pallas import tpu as pltpu


# Row indices inside the packed vector-parameter array (see pack_params).
_LN1_G, _LN1_B, _LN2_G, _LN2_B, _BQKV, _BO, _B1, _B2 = range(8)
_NUM_VEC_ROWS = 8


def _layernorm(x, gamma, beta, eps=1e-6):
    # x: (N, E), gamma/beta: (1, E)
    mean = jnp.mean(x, axis=-1, keepdims=True)
    var = jnp.mean((x - mean) ** 2, axis=-1, keepdims=True)
    return (x - mean) * jax.lax.rsqrt(var + eps) * gamma + beta


def _gelu_exact(x):
    # nn.GELU() default: 0.5 * x * (1 + erf(x / sqrt(2)))
    return 0.5 * x * (1.0 + jax.lax.erf(x * 0.7071067811865476))


def encoder_layer_kernel(
    x_ref, wqkv_ref, wo_ref, w1_ref, w2_ref, vec_ref, o_ref, *, num_heads
):
    _, S, E = x_ref.shape            # block is (1, S, E): one batch element / step
    F = w1_ref.shape[1]
    hd = E // num_heads

    # Leading-dim squeeze only (layout-preserving): (1, S, E) -> (S, E).
    x = x_ref[...].astype(jnp.float32).reshape(S, E)
    vecs = vec_ref[...].astype(jnp.float32)      # (8, max(3E, F))

    ln1_g = vecs[_LN1_G:_LN1_G + 1, :E]
    ln1_b = vecs[_LN1_B:_LN1_B + 1, :E]
    ln2_g = vecs[_LN2_G:_LN2_G + 1, :E]
    ln2_b = vecs[_LN2_B:_LN2_B + 1, :E]
    bqkv = vecs[_BQKV:_BQKV + 1, :3 * E]         # Q bias already pre-scaled
    bo = vecs[_BO:_BO + 1, :E]
    b1 = vecs[_B1:_B1 + 1, :F]
    b2 = vecs[_B2:_B2 + 1, :E]

    # ---- Multi-head attention sublayer (pre-norm) ----
    y = _layernorm(x, ln1_g, ln1_b)
    # One fused QKV projection (scale 1/sqrt(E) is pre-folded into Wq / bq).
    qkv = jnp.dot(y, wqkv_ref[...], preferred_element_type=jnp.float32) + bqkv
    q = qkv[:, :E]
    k = qkv[:, E:2 * E]
    v = qkv[:, 2 * E:]

    # Head-major stacks: (H, S, hd). Built once; stacking along a new leading
    # axis is vreg placement only (no intra-tile shuffle).
    qs = jnp.stack([q[:, h * hd:(h + 1) * hd] for h in range(num_heads)], axis=0)
    ks = jnp.stack([k[:, h * hd:(h + 1) * hd] for h in range(num_heads)], axis=0)
    vs = jnp.stack([v[:, h * hd:(h + 1) * hd] for h in range(num_heads)], axis=0)

    # Head-batched attention: one scores einsum, ONE softmax, one values einsum.
    s = jnp.einsum('hqd,hkd->hqk', qs, ks, preferred_element_type=jnp.float32)
    m = jnp.max(s, axis=-1, keepdims=True)
    p = jnp.exp(s - m)
    inv = 1.0 / jnp.sum(p, axis=-1, keepdims=True)   # exact, per-row only
    w = p * inv
    oh = jnp.einsum('hqk,hkd->hqd', w, vs, preferred_element_type=jnp.float32)

    # Lane-concat heads back to (S, E) and run ONE output-projection matmul.
    cat = jnp.concatenate([oh[h] for h in range(num_heads)], axis=-1)
    attn = jnp.dot(cat, wo_ref[...], preferred_element_type=jnp.float32) + bo
    # dropout -> identity at inference
    x = x + attn

    # ---- Feed-forward sublayer (pre-norm) ----
    y = _layernorm(x, ln2_g, ln2_b)
    h1 = _gelu_exact(jnp.dot(y, w1_ref[...], preferred_element_type=jnp.float32) + b1)
    y = jnp.dot(h1, w2_ref[...], preferred_element_type=jnp.float32) + b2
    # dropout -> identity at inference
    x = x + y

    o_ref[...] = x.reshape(1, S, E).astype(o_ref.dtype)


def pack_params(params):
    """One-off parameter packing. Call ONCE (e.g. at init), not per forward."""
    E = params["wq"].shape[0]
    F = params["w1"].shape[1]
    scale = 1.0 / math.sqrt(float(E))   # d_k = embed_dim (pre-projection query width)

    # Fused QKV weight; fold the attention scale into the Q columns / Q bias.
    wqkv = jnp.concatenate(
        [params["wq"] * scale, params["wk"], params["wv"]], axis=1)   # (E, 3E)

    vmax = max(3 * E, F)
    vecs = jnp.zeros((_NUM_VEC_ROWS, vmax), jnp.float32)
    vecs = vecs.at[_LN1_G, :E].set(params["ln1_g"].reshape(-1))
    vecs = vecs.at[_LN1_B, :E].set(params["ln1_b"].reshape(-1))
    vecs = vecs.at[_LN2_G, :E].set(params["ln2_g"].reshape(-1))
    vecs = vecs.at[_LN2_B, :E].set(params["ln2_b"].reshape(-1))
    vecs = vecs.at[_BQKV, :3 * E].set(jnp.concatenate(
        [params["bq"].reshape(-1) * scale,
         params["bk"].reshape(-1),
         params["bv"].reshape(-1)]))
    vecs = vecs.at[_BO, :E].set(params["bo"].reshape(-1))
    vecs = vecs.at[_B1, :F].set(params["b1"].reshape(-1))
    vecs = vecs.at[_B2, :E].set(params["b2"].reshape(-1))

    return {
        "wqkv": wqkv,
        "wo": params["wo"],
        "w1": params["w1"],
        "w2": params["w2"],
        "vecs": vecs,
    }


def transformer_encoder_layer(x, packed, *, num_heads):
    """Forward pass. `packed` comes from pack_params() (precomputed once)."""
    B, S, E = x.shape
    F = packed["w1"].shape[1]
    vmax = packed["vecs"].shape[1]
    assert E % num_heads == 0

    kernel = functools.partial(encoder_layer_kernel, num_heads=num_heads)

    def full2d(shape):
        return pl.BlockSpec(shape, lambda b: (0, 0))

    # TODO(synk): at large E/F (e.g. E=1024, F=4096) tile the FFN over F
    # (reduction axis last, "arbitrary", f32 accumulator scratch) and tile S for
    # attention so the kernel fits v7x's 64 MiB VMEM; at these toy sizes
    # everything-resident is fine.
    return pl.pallas_call(
        kernel,
        out_shape=jax.ShapeDtypeStruct((B, S, E), x.dtype),
        grid_spec=pltpu.PrefetchScalarGridSpec(
            num_scalar_prefetch=0,
            grid=(B,),   # one batch element per step; parallel over TensorCores
            in_specs=[
                pl.BlockSpec((1, S, E), lambda b: (b, 0, 0)),    # x
                full2d((E, 3 * E)),                              # fused Wqkv
                full2d((E, E)),                                  # Wo
                full2d((E, F)),                                  # W1
                full2d((F, E)),                                  # W2
                full2d((_NUM_VEC_ROWS, vmax)),                   # packed vectors
            ],
            out_specs=pl.BlockSpec((1, S, E), lambda b: (b, 0, 0)),
        ),
        compiler_params=pltpu.CompilerParams(
            dimension_semantics=("parallel",),
            vmem_limit_bytes=32 * 1024 * 1024,
        ),
    )(x, packed["wqkv"], packed["wo"], packed["w1"], packed["w2"], packed["vecs"])


def init_params(key, embed_dim, filter_dim):
    ks = jax.random.split(key, 12)
    scale = 0.02
    f32 = jnp.float32
    return {
        "ln1_g": jnp.ones((1, embed_dim), f32),
        "ln1_b": jnp.zeros((1, embed_dim), f32),
        # per-head Q/K/V Linears concatenated along the output dim -> (E, E)
        "wq": scale * jax.random.normal(ks[0], (embed_dim, embed_dim), f32),
        "bq": scale * jax.random.normal(ks[1], (1, embed_dim), f32),
        "wk": scale * jax.random.normal(ks[2], (embed_dim, embed_dim), f32),
        "bk": scale * jax.random.normal(ks[3], (1, embed_dim), f32),
        "wv": scale * jax.random.normal(ks[4], (embed_dim, embed_dim), f32),
        "bv": scale * jax.random.normal(ks[5], (1, embed_dim), f32),
        "wo": scale * jax.random.normal(ks[6], (embed_dim, embed_dim), f32),
        "bo": scale * jax.random.normal(ks[7], (1, embed_dim), f32),
        "ln2_g": jnp.ones((1, embed_dim), f32),
        "ln2_b": jnp.zeros((1, embed_dim), f32),
        "w1": scale * jax.random.normal(ks[8], (embed_dim, filter_dim), f32),
        "b1": scale * jax.random.normal(ks[9], (1, filter_dim), f32),
        "w2": scale * jax.random.normal(ks[10], (filter_dim, embed_dim), f32),
        "b2": scale * jax.random.normal(ks[11], (1, embed_dim), f32),
    }


def _reference_forward(x, params, *, num_heads):
    """Pure-JAX replica of the PyTorch module (inference) for a tolerance check."""
    E = x.shape[-1]
    hd = E // num_heads
    scale = 1.0 / math.sqrt(float(E))   # d_k = query.size(-1) pre-projection

    def ln(t, g, b, eps=1e-6):
        m = t.mean(-1, keepdims=True)
        v = ((t - m) ** 2).mean(-1, keepdims=True)
        return (t - m) / jnp.sqrt(v + eps) * g + b

    y = ln(x, params["ln1_g"], params["ln1_b"])
    q = y @ params["wq"] + params["bq"]
    k = y @ params["wk"] + params["bk"]
    v = y @ params["wv"] + params["bv"]
    outs = []
    for h in range(num_heads):
        sl = slice(h * hd, (h + 1) * hd)
        s = jnp.einsum('bqd,bkd->bqk', q[..., sl], k[..., sl]) * scale
        w = jax.nn.softmax(s, axis=-1)
        outs.append(jnp.einsum('bqk,bkd->bqd', w, v[..., sl]))
    attn = jnp.concatenate(outs, axis=-1) @ params["wo"] + params["bo"]
    x = x + attn
    y = ln(x, params["ln2_g"], params["ln2_b"])
    h1 = jax.nn.gelu(y @ params["w1"] + params["b1"], approximate=False)
    y = h1 @ params["w2"] + params["b2"]
    return x + y


if __name__ == "__main__":
    # small shapes: batch=2, seq=8, embed_dim=32, heads=4, filter_dim=64
    B, S, E, H, F = 2, 8, 32, 4, 64
    key = jax.random.PRNGKey(0)
    kx, kp = jax.random.split(key)
    x = jax.random.normal(kx, (B, S, E), jnp.float32)
    params = init_params(kp, E, F)

    packed = pack_params(params)            # one-off, outside the forward path
    packed = jax.tree_util.tree_map(jax.block_until_ready, packed)

    out = transformer_encoder_layer(x, packed, num_heads=H)
    out = jax.block_until_ready(out)
    assert out.shape == (B, S, E)

    ref = _reference_forward(x, params, num_heads=H)
    assert jnp.allclose(out, ref, atol=1e-3, rtol=1e-3), float(
        jnp.max(jnp.abs(out - ref)))

    print("KERNEL_OK")
</pallas_src>

<mosaic_0001>
module attributes {stable_mosaic.version = 11 : i64} {
  func.func @encoder_layer_kernel(%arg0: i32, %arg1: memref<1x8x32xf32, #tpu.memory_space<vmem>>, %arg2: memref<32x96xf32, #tpu.memory_space<vmem>>, %arg3: memref<32x32xf32, #tpu.memory_space<vmem>>, %arg4: memref<32x64xf32, #tpu.memory_space<vmem>>, %arg5: memref<64x32xf32, #tpu.memory_space<vmem>>, %arg6: memref<8x96xf32, #tpu.memory_space<vmem>>, %arg7: memref<1x8x32xf32, #tpu.memory_space<vmem>>) attributes {dimension_semantics = [#tpu.dimension_semantics<parallel>], iteration_bounds = array<i64: 2>, scalar_prefetch = 0 : i64, scratch_operands = 0 : i64, tpu.core_type = #tpu.core_type<tc>, window_params = [{transform_indices = @transform_0, window_bounds = array<i64: 1, 8, 32>}, {pipeline_mode = #tpu.pipeline_mode<synchronous>, transform_indices = @transform_1, window_bounds = array<i64: 32, 96>}, {pipeline_mode = #tpu.pipeline_mode<synchronous>, transform_indices = @transform_2, window_bounds = array<i64: 32, 32>}, {pipeline_mode = #tpu.pipeline_mode<synchronous>, transform_indices = @transform_3, window_bounds = array<i64: 32, 64>}, {pipeline_mode = #tpu.pipeline_mode<synchronous>, transform_indices = @transform_4, window_bounds = array<i64: 64, 32>}, {pipeline_mode = #tpu.pipeline_mode<synchronous>, transform_indices = @transform_5, window_bounds = array<i64: 8, 96>}, {transform_indices = @transform_6, window_bounds = array<i64: 1, 8, 32>}]} {
    %c0 = arith.constant 0 : index
    %c0_0 = arith.constant 0 : index
    %c0_1 = arith.constant 0 : index
    %0 = vector.load %arg1[%c0, %c0_0, %c0_1] : memref<1x8x32xf32, #tpu.memory_space<vmem>>, vector<1x8x32xf32>
    %1 = vector.shape_cast %0 : vector<1x8x32xf32> to vector<8x32xf32>
    %c0_2 = arith.constant 0 : index
    %c0_3 = arith.constant 0 : index
    %2 = vector.load %arg6[%c0_2, %c0_3] : memref<8x96xf32, #tpu.memory_space<vmem>>, vector<8x96xf32>
    %3 = vector.extract_strided_slice %2 {offsets = [0, 0], sizes = [1, 32], strides = [1, 1]} : vector<8x96xf32> to vector<1x32xf32>
    %4 = vector.extract_strided_slice %2 {offsets = [1, 0], sizes = [1, 32], strides = [1, 1]} : vector<8x96xf32> to vector<1x32xf32>
    %5 = vector.extract_strided_slice %2 {offsets = [2, 0], sizes = [1, 32], strides = [1, 1]} : vector<8x96xf32> to vector<1x32xf32>
    %6 = vector.extract_strided_slice %2 {offsets = [3, 0], sizes = [1, 32], strides = [1, 1]} : vector<8x96xf32> to vector<1x32xf32>
    %7 = vector.extract_strided_slice %2 {offsets = [4, 0], sizes = [1, 96], strides = [1, 1]} : vector<8x96xf32> to vector<1x96xf32>
    %8 = vector.extract_strided_slice %2 {offsets = [5, 0], sizes = [1, 32], strides = [1, 1]} : vector<8x96xf32> to vector<1x32xf32>
    %9 = vector.extract_strided_slice %2 {offsets = [6, 0], sizes = [1, 64], strides = [1, 1]} : vector<8x96xf32> to vector<1x64xf32>
    %10 = vector.extract_strided_slice %2 {offsets = [7, 0], sizes = [1, 32], strides = [1, 1]} : vector<8x96xf32> to vector<1x32xf32>
    %cst = arith.constant dense<0.000000e+00> : vector<8xf32>
    %11 = vector.multi_reduction <add>, %1, %cst [1] : vector<8x32xf32> to vector<8xf32>
    %12 = vector.shape_cast %11 : vector<8xf32> to vector<8x1xf32>
    %cst_4 = arith.constant 3.200000e+01 : f32
    %13 = vector.broadcast %cst_4 : f32 to vector<8x1xf32>
    %14 = arith.divf %12, %13 : vector<8x1xf32>
    %15 = vector.broadcast %14 : vector<8x1xf32> to vector<8x32xf32>
    %16 = arith.subf %1, %15 : vector<8x32xf32>
    %17 = arith.mulf %16, %16 : vector<8x32xf32>
    %cst_5 = arith.constant dense<0.000000e+00> : vector<8xf32>
    %18 = vector.multi_reduction <add>, %17, %cst_5 [1] : vector<8x32xf32> to vector<8xf32>
    %19 = vector.shape_cast %18 : vector<8xf32> to vector<8x1xf32>
    %cst_6 = arith.constant 3.200000e+01 : f32
    %20 = vector.broadcast %cst_6 : f32 to vector<8x1xf32>
    %21 = arith.divf %19, %20 : vector<8x1xf32>
    %22 = vector.broadcast %14 : vector<8x1xf32> to vector<8x32xf32>
    %23 = arith.subf %1, %22 : vector<8x32xf32>
    %cst_7 = arith.constant 9.99999997E-7 : f32
    %24 = vector.broadcast %cst_7 : f32 to vector<8x1xf32>
    %25 = arith.addf %21, %24 : vector<8x1xf32>
    %26 = math.rsqrt %25 : vector<8x1xf32>
    %27 = vector.broadcast %26 : vector<8x1xf32> to vector<8x32xf32>
    %28 = arith.mulf %23, %27 : vector<8x32xf32>
    %29 = vector.broadcast %3 : vector<1x32xf32> to vector<8x32xf32>
    %30 = arith.mulf %28, %29 : vector<8x32xf32>
    %31 = vector.broadcast %4 : vector<1x32xf32> to vector<8x32xf32>
    %32 = arith.addf %30, %31 : vector<8x32xf32>
    %c0_8 = arith.constant 0 : index
    %c0_9 = arith.constant 0 : index
    %33 = vector.load %arg2[%c0_8, %c0_9] : memref<32x96xf32, #tpu.memory_space<vmem>>, vector<32x96xf32>
    %cst_10 = arith.constant dense<0.000000e+00> : vector<8x96xf32>
    %34 = tpu.matmul %32, %33, %cst_10 {dimension_numbers = #tpu.dot_dimension_numbers<[1], [0], [0], [1], [0, 0, 1, 1], [], []>} : vector<8x32xf32>, vector<32x96xf32>, vector<8x96xf32> -> vector<8x96xf32>
    %35 = vector.broadcast %7 : vector<1x96xf32> to vector<8x96xf32>
    %36 = arith.addf %34, %35 : vector<8x96xf32>
    %37 = vector.extract_strided_slice %36 {offsets = [0, 0], sizes = [8, 32], strides = [1, 1]} : vector<8x96xf32> to vector<8x32xf32>
    %38 = vector.extract_strided_slice %36 {offsets = [0, 32], sizes = [8, 32], strides = [1, 1]} : vector<8x96xf32> to vector<8x32xf32>
    %39 = vector.extract_strided_slice %36 {offsets = [0, 64], sizes = [8, 32], strides = [1, 1]} : vector<8x96xf32> to vector<8x32xf32>
    %40 = vector.extract_strided_slice %37 {offsets = [0, 0], sizes = [8, 8], strides = [1, 1]} : vector<8x32xf32> to vector<8x8xf32>
    %41 = vector.extract_strided_slice %37 {offsets = [0, 8], sizes = [8, 8], strides = [1, 1]} : vector<8x32xf32> to vector<8x8xf32>
    %42 = vector.extract_strided_slice %37 {offsets = [0, 16], sizes = [8, 8], strides = [1, 1]} : vector<8x32xf32> to vector<8x8xf32>
    %43 = vector.extract_strided_slice %37 {offsets = [0, 24], sizes = [8, 8], strides = [1, 1]} : vector<8x32xf32> to vector<8x8xf32>
    %44 = vector.shape_cast %40 : vector<8x8xf32> to vector<1x8x8xf32>
    %45 = vector.shape_cast %41 : vector<8x8xf32> to vector<1x8x8xf32>
    %46 = vector.shape_cast %42 : vector<8x8xf32> to vector<1x8x8xf32>
    %47 = vector.shape_cast %43 : vector<8x8xf32> to vector<1x8x8xf32>
    %48 = tpu.concatenate %44, %45, %46, %47 in 0 : vector<1x8x8xf32>, vector<1x8x8xf32>, vector<1x8x8xf32>, vector<1x8x8xf32> -> vector<4x8x8xf32>
    %49 = vector.extract_strided_slice %38 {offsets = [0, 0], sizes = [8, 8], strides = [1, 1]} : vector<8x32xf32> to vector<8x8xf32>
    %50 = vector.extract_strided_slice %38 {offsets = [0, 8], sizes = [8, 8], strides = [1, 1]} : vector<8x32xf32> to vector<8x8xf32>
    %51 = vector.extract_strided_slice %38 {offsets = [0, 16], sizes = [8, 8], strides = [1, 1]} : vector<8x32xf32> to vector<8x8xf32>
    %52 = vector.extract_strided_slice %38 {offsets = [0, 24], sizes = [8, 8], strides = [1, 1]} : vector<8x32xf32> to vector<8x8xf32>
    %53 = vector.shape_cast %49 : vector<8x8xf32> to vector<1x8x8xf32>
    %54 = vector.shape_cast %50 : vector<8x8xf32> to vector<1x8x8xf32>
    %55 = vector.shape_cast %51 : vector<8x8xf32> to vector<1x8x8xf32>
    %56 = vector.shape_cast %52 : vector<8x8xf32> to vector<1x8x8xf32>
    %57 = tpu.concatenate %53, %54, %55, %56 in 0 : vector<1x8x8xf32>, vector<1x8x8xf32>, vector<1x8x8xf32>, vector<1x8x8xf32> -> vector<4x8x8xf32>
    %58 = vector.extract_strided_slice %39 {offsets = [0, 0], sizes = [8, 8], strides = [1, 1]} : vector<8x32xf32> to vector<8x8xf32>
    %59 = vector.extract_strided_slice %39 {offsets = [0, 8], sizes = [8, 8], strides = [1, 1]} : vector<8x32xf32> to vector<8x8xf32>
    %60 = vector.extract_strided_slice %39 {offsets = [0, 16], sizes = [8, 8], strides = [1, 1]} : vector<8x32xf32> to vector<8x8xf32>
    %61 = vector.extract_strided_slice %39 {offsets = [0, 24], sizes = [8, 8], strides = [1, 1]} : vector<8x32xf32> to vector<8x8xf32>
    %62 = vector.shape_cast %58 : vector<8x8xf32> to vector<1x8x8xf32>
    %63 = vector.shape_cast %59 : vector<8x8xf32> to vector<1x8x8xf32>
    %64 = vector.shape_cast %60 : vector<8x8xf32> to vector<1x8x8xf32>
    %65 = vector.shape_cast %61 : vector<8x8xf32> to vector<1x8x8xf32>
    %66 = tpu.concatenate %62, %63, %64, %65 in 0 : vector<1x8x8xf32>, vector<1x8x8xf32>, vector<1x8x8xf32>, vector<1x8x8xf32> -> vector<4x8x8xf32>
    "tpu.trace_start"() <{level = 10 : i32, message = "hqd,hkd->hqk"}> : () -> ()
    %cst_11 = arith.constant dense<0.000000e+00> : vector<4x8x8xf32>
    %67 = tpu.matmul %48, %57, %cst_11 {dimension_numbers = #tpu.dot_dimension_numbers<[2], [2], [1], [1], [0, 0, 0, 1, 1, 1], [0], [0]>} : vector<4x8x8xf32>, vector<4x8x8xf32>, vector<4x8x8xf32> -> vector<4x8x8xf32>
    "tpu.trace_stop"() : () -> ()
    %cst_12 = arith.constant dense<0xFF800000> : vector<4x8xf32>
    %68 = vector.multi_reduction <maximumf>, %67, %cst_12 [2] : vector<4x8x8xf32> to vector<4x8xf32>
    %69 = vector.shape_cast %68 : vector<4x8xf32> to vector<4x8x1xf32>
    %70 = vector.broadcast %69 : vector<4x8x1xf32> to vector<4x8x8xf32>
    %71 = arith.subf %67, %70 : vector<4x8x8xf32>
    %72 = math.exp %71 : vector<4x8x8xf32>
    %cst_13 = arith.constant dense<0.000000e+00> : vector<4x8xf32>
    %73 = vector.multi_reduction <add>, %72, %cst_13 [2] : vector<4x8x8xf32> to vector<4x8xf32>
    %74 = vector.shape_cast %73 : vector<4x8xf32> to vector<4x8x1xf32>
    %cst_14 = arith.constant 1.000000e+00 : f32
    %75 = vector.broadcast %cst_14 : f32 to vector<4x8x1xf32>
    %76 = arith.divf %75, %74 : vector<4x8x1xf32>
    %77 = vector.broadcast %76 : vector<4x8x1xf32> to vector<4x8x8xf32>
    %78 = arith.mulf %72, %77 : vector<4x8x8xf32>
    "tpu.trace_start"() <{level = 10 : i32, message = "hqk,hkd->hqd"}> : () -> ()
    %cst_15 = arith.constant dense<0.000000e+00> : vector<4x8x8xf32>
    %79 = tpu.matmul %78, %66, %cst_15 {dimension_numbers = #tpu.dot_dimension_numbers<[2], [1], [1], [2], [0, 0, 0, 1, 1, 2], [0], [0]>} : vector<4x8x8xf32>, vector<4x8x8xf32>, vector<4x8x8xf32> -> vector<4x8x8xf32>
    "tpu.trace_stop"() : () -> ()
    %80 = vector.extract_strided_slice %79 {offsets = [0, 0, 0], sizes = [1, 8, 8], strides = [1, 1, 1]} : vector<4x8x8xf32> to vector<1x8x8xf32>
    %81 = vector.shape_cast %80 : vector<1x8x8xf32> to vector<8x8xf32>
    %82 = vector.extract_strided_slice %79 {offsets = [1, 0, 0], sizes = [1, 8, 8], strides = [1, 1, 1]} : vector<4x8x8xf32> to vector<1x8x8xf32>
    %83 = vector.shape_cast %82 : vector<1x8x8xf32> to vector<8x8xf32>
    %84 = vector.extract_strided_slice %79 {offsets = [2, 0, 0], sizes = [1, 8, 8], strides = [1, 1, 1]} : vector<4x8x8xf32> to vector<1x8x8xf32>
    %85 = vector.shape_cast %84 : vector<1x8x8xf32> to vector<8x8xf32>
    %86 = vector.extract_strided_slice %79 {offsets = [3, 0, 0], sizes = [1, 8, 8], strides = [1, 1, 1]} : vector<4x8x8xf32> to vector<1x8x8xf32>
    %87 = vector.shape_cast %86 : vector<1x8x8xf32> to vector<8x8xf32>
    %88 = tpu.concatenate %81, %83, %85, %87 in 1 : vector<8x8xf32>, vector<8x8xf32>, vector<8x8xf32>, vector<8x8xf32> -> vector<8x32xf32>
    %c0_16 = arith.constant 0 : index
    %c0_17 = arith.constant 0 : index
    %89 = vector.load %arg3[%c0_16, %c0_17] : memref<32x32xf32, #tpu.memory_space<vmem>>, vector<32x32xf32>
    %cst_18 = arith.constant dense<0.000000e+00> : vector<8x32xf32>
    %90 = tpu.matmul %88, %89, %cst_18 {dimension_numbers = #tpu.dot_dimension_numbers<[1], [0], [0], [1], [0, 0, 1, 1], [], []>} : vector<8x32xf32>, vector<32x32xf32>, vector<8x32xf32> -> vector<8x32xf32>
    %91 = vector.broadcast %8 : vector<1x32xf32> to vector<8x32xf32>
    %92 = arith.addf %90, %91 : vector<8x32xf32>
    %93 = arith.addf %1, %92 : vector<8x32xf32>
    %cst_19 = arith.constant dense<0.000000e+00> : vector<8xf32>
    %94 = vector.multi_reduction <add>, %93, %cst_19 [1] : vector<8x32xf32> to vector<8xf32>
    %95 = vector.shape_cast %94 : vector<8xf32> to vector<8x1xf32>
    %cst_20 = arith.constant 3.200000e+01 : f32
    %96 = vector.broadcast %cst_20 : f32 to vector<8x1xf32>
    %97 = arith.divf %95, %96 : vector<8x1xf32>
    %98 = vector.broadcast %97 : vector<8x1xf32> to vector<8x32xf32>
    %99 = arith.subf %93, %98 : vector<8x32xf32>
    %100 = arith.mulf %99, %99 : vector<8x32xf32>
    %cst_21 = arith.constant dense<0.000000e+00> : vector<8xf32>
    %101 = vector.multi_reduction <add>, %100, %cst_21 [1] : vector<8x32xf32> to vector<8xf32>
    %102 = vector.shape_cast %101 : vector<8xf32> to vector<8x1xf32>
    %cst_22 = arith.constant 3.200000e+01 : f32
    %103 = vector.broadcast %cst_22 : f32 to vector<8x1xf32>
    %104 = arith.divf %102, %103 : vector<8x1xf32>
    %105 = vector.broadcast %97 : vector<8x1xf32> to vector<8x32xf32>
    %106 = arith.subf %93, %105 : vector<8x32xf32>
    %cst_23 = arith.constant 9.99999997E-7 : f32
    %107 = vector.broadcast %cst_23 : f32 to vector<8x1xf32>
    %108 = arith.addf %104, %107 : vector<8x1xf32>
    %109 = math.rsqrt %108 : vector<8x1xf32>
    %110 = vector.broadcast %109 : vector<8x1xf32> to vector<8x32xf32>
    %111 = arith.mulf %106, %110 : vector<8x32xf32>
    %112 = vector.broadcast %5 : vector<1x32xf32> to vector<8x32xf32>
    %113 = arith.mulf %111, %112 : vector<8x32xf32>
    %114 = vector.broadcast %6 : vector<1x32xf32> to vector<8x32xf32>
    %115 = arith.addf %113, %114 : vector<8x32xf32>
    %c0_24 = arith.constant 0 : index
    %c0_25 = arith.constant 0 : index
    %116 = vector.load %arg4[%c0_24, %c0_25] : memref<32x64xf32, #tpu.memory_space<vmem>>, vector<32x64xf32>
    %cst_26 = arith.constant dense<0.000000e+00> : vector<8x64xf32>
    %117 = tpu.matmul %115, %116, %cst_26 {dimension_numbers = #tpu.dot_dimension_numbers<[1], [0], [0], [1], [0, 0, 1, 1], [], []>} : vector<8x32xf32>, vector<32x64xf32>, vector<8x64xf32> -> vector<8x64xf32>
    %118 = vector.broadcast %9 : vector<1x64xf32> to vector<8x64xf32>
    %119 = arith.addf %117, %118 : vector<8x64xf32>
    %cst_27 = arith.constant 5.000000e-01 : f32
    %120 = vector.broadcast %cst_27 : f32 to vector<8x64xf32>
    %121 = arith.mulf %120, %119 : vector<8x64xf32>
    %cst_28 = arith.constant 0.707106769 : f32
    %122 = vector.broadcast %cst_28 : f32 to vector<8x64xf32>
    %123 = arith.mulf %119, %122 : vector<8x64xf32>
    %124 = math.erf %123 : vector<8x64xf32>
    %cst_29 = arith.constant 1.000000e+00 : f32
    %125 = vector.broadcast %cst_29 : f32 to vector<8x64xf32>
    %126 = arith.addf %125, %124 : vector<8x64xf32>
    %127 = arith.mulf %121, %126 : vector<8x64xf32>
    %c0_30 = arith.constant 0 : index
    %c0_31 = arith.constant 0 : index
    %128 = vector.load %arg5[%c0_30, %c0_31] : memref<64x32xf32, #tpu.memory_space<vmem>>, vector<64x32xf32>
    %cst_32 = arith.constant dense<0.000000e+00> : vector<8x32xf32>
    %129 = tpu.matmul %127, %128, %cst_32 {dimension_numbers = #tpu.dot_dimension_numbers<[1], [0], [0], [1], [0, 0, 1, 1], [], []>} : vector<8x64xf32>, vector<64x32xf32>, vector<8x32xf32> -> vector<8x32xf32>
    %130 = vector.broadcast %10 : vector<1x32xf32> to vector<8x32xf32>
    %131 = arith.addf %129, %130 : vector<8x32xf32>
    %132 = arith.addf %93, %131 : vector<8x32xf32>
    %133 = vector.shape_cast %132 : vector<8x32xf32> to vector<1x8x32xf32>
    %c0_33 = arith.constant 0 : index
    %c0_34 = arith.constant 0 : index
    %c0_35 = arith.constant 0 : index
    %134 = vector.load %arg7[%c0_33, %c0_34, %c0_35] : memref<1x8x32xf32, #tpu.memory_space<vmem>>, vector<1x8x32xf32>
    tpu.vector_store %arg7[%c0_33, %c0_34, %c0_35], %133 {strides = array<i32>} : memref<1x8x32xf32, #tpu.memory_space<vmem>>, vector<1x8x32xf32>,
    return
  }
  func.func @transform_0(%arg0: i32) -> (i32, i32, i32) {
    %c0_i32 = arith.constant 0 : i32
    %c0_i32_0 = arith.constant 0 : i32
    %c0_i32_1 = arith.constant 0 : i32
    return %arg0, %c0_i32, %c0_i32_0 : i32, i32, i32
  }
  func.func @transform_1(%arg0: i32) -> (i32, i32) {
    %c0_i32 = arith.constant 0 : i32
    %c0_i32_0 = arith.constant 0 : i32
    %c0_i32_1 = arith.constant 0 : i32
    return %c0_i32, %c0_i32_0 : i32, i32
  }
  func.func @transform_2(%arg0: i32) -> (i32, i32) {
    %c0_i32 = arith.constant 0 : i32
    %c0_i32_0 = arith.constant 0 : i32
    %c0_i32_1 = arith.constant 0 : i32
    return %c0_i32, %c0_i32_0 : i32, i32
  }
  func.func @transform_3(%arg0: i32) -> (i32, i32) {
    %c0_i32 = arith.constant 0 : i32
    %c0_i32_0 = arith.constant 0 : i32
    %c0_i32_1 = arith.constant 0 : i32
    return %c0_i32, %c0_i32_0 : i32, i32
  }
  func.func @transform_4(%arg0: i32) -> (i32, i32) {
    %c0_i32 = arith.constant 0 : i32
    %c0_i32_0 = arith.constant 0 : i32
    %c0_i32_1 = arith.constant 0 : i32
    return %c0_i32, %c0_i32_0 : i32, i32
  }
  func.func @transform_5(%arg0: i32) -> (i32, i32) {
    %c0_i32 = arith.constant 0 : i32
    %c0_i32_0 = arith.constant 0 : i32
    %c0_i32_1 = arith.constant 0 : i32
    return %c0_i32, %c0_i32_0 : i32, i32
  }
  func.func @transform_6(%arg0: i32) -> (i32, i32, i32) {
    %c0_i32 = arith.constant 0 : i32
    %c0_i32_0 = arith.constant 0 : i32
    %c0_i32_1 = arith.constant 0 : i32
    return %arg0, %c0_i32, %c0_i32_0 : i32, i32, i32
  }
}

</mosaic_0001>

<llo_original>
// kernel: tpu_custom_call.1
$region0: #{tpu_custom_call.1}
  #allocation0 [shape = 'u32[]', space=smem, size = 0x4, offset = 0x4, fixed_abs, tag = 'smem constant byte address 0x4 - core index']
  #allocation1 [shape = 'u32[144,128]{1,0:T(1,128)}', space=vmem, size = 0x12000, scoped, tag = 'internal scratch']
  %s0 = inlined_call_operand.hbm [shape: f32[2,8,32], index: 0, kind: input, shape index: {}]
  %s1 = inlined_call_operand.vmem [shape: f32[32,96], index: 1, kind: input, shape index: {}]
  %s2 = inlined_call_operand.vmem [shape: f32[32,32], index: 2, kind: input, shape index: {}]
  %s3 = inlined_call_operand.vmem [shape: f32[32,64], index: 3, kind: input, shape index: {}]
  %s4 = inlined_call_operand.vmem [shape: f32[64,32], index: 4, kind: input, shape index: {}]
  %s5 = inlined_call_operand.vmem [shape: f32[8,96], index: 5, kind: input, shape index: {}]
  %s6 = inlined_call_operand.hbm [shape: f32[2,8,32], index: 6, kind: output, shape index: {}]
  %s7 = sld [smem:[#allocation0]]
  $region61: #{tpu_custom_call.1} parent=0
    _
  %s9 = ssub.s32 1, %s7
  %s10 = scalar_select 0, %s9, %s7
  $region1: #{tpu_custom_call.1} parent=0
    #allocation2 [shape = 'u8[8192]{0}', space=vmem, size = 0x2000, scoped, tag = 'input window, operand 0']
    #allocation3 [shape = 's32[2]{0}', space=sflag, size = 0x8, scoped, tag = 'scoped memory for tpu_custom_call.1']
    #allocation4 [shape = 's32[2]{0}', space=sflag, size = 0x8, scoped, tag = 'scoped memory for tpu_custom_call.1']
    #allocation5 [shape = 'u8[8192]{0}', space=vmem, size = 0x2000, scoped, tag = 'output window, operand 0']
    %11 = vsyncpa [#allocation3], 0
    %s12 = scalar_lea.sflag [#allocation3], 1
    %13 = vsyncpa %s12, 0
    %14 = vsyncpa [#allocation4], 0
    %s15 = scalar_lea.sflag [#allocation4], 1
    %16 = vsyncpa %s15, 0
    loop: start=0, step=1, limit=4
    $region2: #{tpu_custom_call.1} parent=1 // loop_pre_header
      _
    $region3: #{tpu_custom_call.1} parent=1 // loop_header
      %s18 = sphi 0, %s22
      %p19 = scmp.ge.s32.totalorder %s18, 4
      %s28 = sphi 0, %s30
      %s31 = sphi 0, %s28
      %s32 = sphi 0, %s31
      %s48 = sphi 0, %s32
      %s52 = sphi 0, %s52
      %s54 = sphi 0, %s52
      %s55 = sphi 0, %s54
      %s69 = sphi 0, %s55
      %s73 = sphi 0, %s73
      %s75 = sphi 0, %s73
      %s76 = sphi 0, %s75
      %s90 = sphi 0, %s76
      %s94 = sphi 0, %s94
      %s96 = sphi 0, %s94
      %s97 = sphi 0, %s96
      %s111 = sphi 0, %s97
      %s115 = sphi 0, %s115
      %s117 = sphi 0, %s115
      %s118 = sphi 0, %s117
      %s132 = sphi 0, %s118
      %s136 = sphi 0, %s136
      %s138 = sphi 0, %s136
      %s139 = sphi 0, %s138
      %s153 = sphi 0, %s139
      %s159 = sphi 0, %s161
      %s162 = sphi 0, %s159
      %s163 = sphi 0, %s162
      %s179 = sphi 0, %s163
    $region4: #{tpu_custom_call.1} parent=1 // loop_header_branch
      %21 = sbr.rel (%p19) target = $region8
    $region5: #{tpu_custom_call.1} parent=1 // loop_body
      %s23 = ssub.s32 %s18, 1
      %s24 = ssub.s32 %s18, 2
      %s25 = sadd.s32 %s18, 1
      %s26 = ssub.s32 %s18, %s25
      %p27 = scmp.eq.s32.totalorder %s26, 0
      %s29 = sadd.s32 %s28, 1
      %s30 = scalar_select %p27, %s28, %s29
      %p33 = pneg %p27
      %p34 = scmp.eq.s32.totalorder %s18, 1
      %p35 = por %p33, %p34
      %p36 = scmp.ne.s32.totalorder %s28, %s31
      %p37 = scmp.eq.s32.totalorder %s18, 0
      %p38 = por %p36, %p37
      %p39 = scmp.ne.s32.totalorder %s28, %s31
      %p40 = scmp.eq.s32.totalorder %s23, 1
      %p41 = por %p39, %p40
      %p42 = scmp.ne.s32.totalorder %s31, %s32
      %p43 = scmp.eq.s32.totalorder %s23, 0
      %p44 = por %p42, %p43
      %p45 = scmp.ne.s32.totalorder %s31, %s32
      %p46 = scmp.eq.s32.totalorder %s24, 1
      %p47 = por %p45, %p46
      %p49 = scmp.ne.s32.totalorder %s32, %s48
      %p50 = scmp.eq.s32.totalorder %s24, 0
      %p51 = por %p49, %p50
      %s53 = sadd.s32 %s52, 1
      %p56 = scmp.eq.s32.totalorder %s18, 1
      %p57 = scmp.ne.s32.totalorder %s52, %s54
      %p58 = scmp.eq.s32.totalorder %s18, 0
      %p59 = por %p57, %p58
      %p60 = scmp.ne.s32.totalorder %s52, %s54
      %p61 = scmp.eq.s32.totalorder %s23, 1
      %p62 = por %p60, %p61
      %p63 = scmp.ne.s32.totalorder %s54, %s55
      %p64 = scmp.eq.s32.totalorder %s23, 0
      %p65 = por %p63, %p64
      %p66 = scmp.ne.s32.totalorder %s54, %s55
      %p67 = scmp.eq.s32.totalorder %s24, 1
      %p68 = por %p66, %p67
      %p70 = scmp.ne.s32.totalorder %s55, %s69
      %p71 = scmp.eq.s32.totalorder %s24, 0
      %p72 = por %p70, %p71
      %s74 = sadd.s32 %s73, 1
      %p77 = scmp.eq.s32.totalorder %s18, 1
      %p78 = scmp.ne.s32.totalorder %s73, %s75
      %p79 = scmp.eq.s32.totalorder %s18, 0
      %p80 = por %p78, %p79
      %p81 = scmp.ne.s32.totalorder %s73, %s75
      %p82 = scmp.eq.s32.totalorder %s23, 1
      %p83 = por %p81, %p82
      %p84 = scmp.ne.s32.totalorder %s75, %s76
      %p85 = scmp.eq.s32.totalorder %s23, 0
      %p86 = por %p84, %p85
      %p87 = scmp.ne.s32.totalorder %s75, %s76
      %p88 = scmp.eq.s32.totalorder %s24, 1
      %p89 = por %p87, %p88
      %p91 = scmp.ne.s32.totalorder %s76, %s90
      %p92 = scmp.eq.s32.totalorder %s24, 0
      %p93 = por %p91, %p92
      %s95 = sadd.s32 %s94, 1
      %p98 = scmp.eq.s32.totalorder %s18, 1
      %p99 = scmp.ne.s32.totalorder %s94, %s96
      %p100 = scmp.eq.s32.totalorder %s18, 0
      %p101 = por %p99, %p100
      %p102 = scmp.ne.s32.totalorder %s94, %s96
      %p103 = scmp.eq.s32.totalorder %s23, 1
      %p104 = por %p102, %p103
      %p105 = scmp.ne.s32.totalorder %s96, %s97
      %p106 = scmp.eq.s32.totalorder %s23, 0
      %p107 = por %p105, %p106
      %p108 = scmp.ne.s32.totalorder %s96, %s97
      %p109 = scmp.eq.s32.totalorder %s24, 1
      %p110 = por %p108, %p109
      %p112 = scmp.ne.s32.totalorder %s97, %s111
      %p113 = scmp.eq.s32.totalorder %s24, 0
      %p114 = por %p112, %p113
      %s116 = sadd.s32 %s115, 1
      %p119 = scmp.eq.s32.totalorder %s18, 1
      %p120 = scmp.ne.s32.totalorder %s115, %s117
      %p121 = scmp.eq.s32.totalorder %s18, 0
      %p122 = por %p120, %p121
      %p123 = scmp.ne.s32.totalorder %s115, %s117
      %p124 = scmp.eq.s32.totalorder %s23, 1
      %p125 = por %p123, %p124
      %p126 = scmp.ne.s32.totalorder %s117, %s118
      %p127 = scmp.eq.s32.totalorder %s23, 0
      %p128 = por %p126, %p127
      %p129 = scmp.ne.s32.totalorder %s117, %s118
      %p130 = scmp.eq.s32.totalorder %s24, 1
      %p131 = por %p129, %p130
      %p133 = scmp.ne.s32.totalorder %s118, %s132
      %p134 = scmp.eq.s32.totalorder %s24, 0
      %p135 = por %p133, %p134
      %s137 = sadd.s32 %s136, 1
      %p140 = scmp.eq.s32.totalorder %s18, 1
      %p141 = scmp.ne.s32.totalorder %s136, %s138
      %p142 = scmp.eq.s32.totalorder %s18, 0
      %p143 = por %p141, %p142
      %p144 = scmp.ne.s32.totalorder %s136, %s138
      %p145 = scmp.eq.s32.totalorder %s23, 1
      %p146 = por %p144, %p145
      %p147 = scmp.ne.s32.totalorder %s138, %s139
      %p148 = scmp.eq.s32.totalorder %s23, 0
      %p149 = por %p147, %p148
      %p150 = scmp.ne.s32.totalorder %s138, %s139
      %p151 = scmp.eq.s32.totalorder %s24, 1
      %p152 = por %p150, %p151
      %p154 = scmp.ne.s32.totalorder %s139, %s153
      %p155 = scmp.eq.s32.totalorder %s24, 0
      %p156 = por %p154, %p155
      %s157 = ssub.s32 %s18, %s25
      %p158 = scmp.eq.s32.totalorder %s157, 0
      %s160 = sadd.s32 %s159, 1
      %s161 = scalar_select %p158, %s159, %s160
      %p164 = pneg %p158
      %p165 = scmp.eq.s32.totalorder %s18, 1
      %p166 = por %p164, %p165
      %p167 = scmp.ne.s32.totalorder %s159, %s162
      %p168 = scmp.eq.s32.totalorder %s18, 0
      %p169 = por %p167, %p168
      %p170 = scmp.ne.s32.totalorder %s159, %s162
      %p171 = scmp.eq.s32.totalorder %s23, 1
      %p172 = por %p170, %p171
      %p173 = scmp.ne.s32.totalorder %s162, %s163
      %p174 = scmp.eq.s32.totalorder %s23, 0
      %p175 = por %p173, %p174
      %p176 = scmp.ne.s32.totalorder %s162, %s163
      %p177 = scmp.eq.s32.totalorder %s24, 1
      %p178 = por %p176, %p177
      %p180 = scmp.ne.s32.totalorder %s163, %s179
      %p181 = scmp.eq.s32.totalorder %s24, 0
      %p182 = por %p180, %p181
      %p183 = scmp.le.s32.totalorder 1, %s18
      %p184 = scmp.lt.s32.totalorder %s18, 3
      %p185 = pnand %p183, %p184
      %p186 = pneg %p185
      // Predicated region
      $region9: #{tpu_custom_call.1} parent=5 // pred_check
        _
      $region10: #{tpu_custom_call.1} parent=5 // pred_check_branch
        %188 = sbr.rel (%p185) target = $region12
      $region11: #{tpu_custom_call.1} parent=5 // pred_region
        %s189 = ssub.s32 %s18, 1
        // Predicated region
        $region13: #{tpu_custom_call.1} parent=11 // pred_check
          %p190 = pneg %p65
        $region14: #{tpu_custom_call.1} parent=11 // pred_check_branch
          %192 = sbr.rel (%p190) target = $region16
        $region15: #{tpu_custom_call.1} parent=11 // pred_region
          _
        $region16: #{tpu_custom_call.1} parent=11 // pred_fallthru
          _
        // Predicated region
        $region17: #{tpu_custom_call.1} parent=11 // pred_check
          %p193 = pneg %p86
        $region18: #{tpu_custom_call.1} parent=11 // pred_check_branch
          %195 = sbr.rel (%p193) target = $region20
        $region19: #{tpu_custom_call.1} parent=11 // pred_region
          _
        $region20: #{tpu_custom_call.1} parent=11 // pred_fallthru
          _
        // Predicated region
        $region21: #{tpu_custom_call.1} parent=11 // pred_check
          %p196 = pneg %p107
        $region22: #{tpu_custom_call.1} parent=11 // pred_check_branch
          %198 = sbr.rel (%p196) target = $region24
        $region23: #{tpu_custom_call.1} parent=11 // pred_region
          _
        $region24: #{tpu_custom_call.1} parent=11 // pred_fallthru
          _
        // Predicated region
        $region25: #{tpu_custom_call.1} parent=11 // pred_check
          %p199 = pneg %p128
        $region26: #{tpu_custom_call.1} parent=11 // pred_check_branch
          %201 = sbr.rel (%p199) target = $region28
        $region27: #{tpu_custom_call.1} parent=11 // pred_region
          _
        $region28: #{tpu_custom_call.1} parent=11 // pred_fallthru
          _
        // Predicated region
        $region29: #{tpu_custom_call.1} parent=11 // pred_check
          %p202 = pneg %p149
        $region30: #{tpu_custom_call.1} parent=11 // pred_check_branch
          %204 = sbr.rel (%p202) target = $region32
        $region31: #{tpu_custom_call.1} parent=11 // pred_region
          _
        $region32: #{tpu_custom_call.1} parent=11 // pred_fallthru
          _
      $region12: #{tpu_custom_call.1} parent=5 // pred_fallthru
        _
      %p205 = scmp.lt.s32.totalorder %s18, 2
      // Predicated region
      $region33: #{tpu_custom_call.1} parent=5 // pred_check
        %p206 = pneg %p205
      $region34: #{tpu_custom_call.1} parent=5 // pred_check_branch
        %208 = sbr.rel (%p206) target = $region36
      $region35: #{tpu_custom_call.1} parent=5 // pred_region
        // Predicated region
        $region37: #{tpu_custom_call.1} parent=35 // pred_check
          %p209 = pneg %p38
        $region38: #{tpu_custom_call.1} parent=35 // pred_check_branch
          %211 = sbr.rel (%p209) target = $region40
        $region39: #{tpu_custom_call.1} parent=35 // pred_region
          %s212 = sand.u32 %s28, 1
          %s213 = scalar_lea.sflag [#allocation3], %s212
          %s214 = sand.u32 %s28, 1
          %s215 = smul.addr %s214, 8
          %s216 = scalar_lea.vmem [#allocation2], %s215
          %s218 = ssub.s32 128, 128
          %219 = vsyncadd %s213, %s218
          %s220 = smul.addr %s18, 128
          %s221 = scalar_lea.hbm %s0, %s220
          %s223 = sshll.u32 %s216, 4
          %s224 = int_to_ptr.vmem [resolvable:$true] %s223
          %226 = dma.hbm_to_vmem [thread:$0]  %s221, 128, %s224, %s213
        $region40: #{tpu_custom_call.1} parent=35 // pred_fallthru
          _
      $region36: #{tpu_custom_call.1} parent=5 // pred_fallthru
        _
      %p227 = scmp.le.s32.totalorder 1, %s18
      %p228 = scmp.lt.s32.totalorder %s18, 3
      %p229 = pnand %p227, %p228
      %p230 = pneg %p229
      // Predicated region
      $region41: #{tpu_custom_call.1} parent=5 // pred_check
        _
      $region42: #{tpu_custom_call.1} parent=5 // pred_check_branch
        %232 = sbr.rel (%p229) target = $region44
      $region43: #{tpu_custom_call.1} parent=5 // pred_region
        %s233 = ssub.s32 %s18, 1
        %s234 = sand.u32 %s31, 1
        %s235 = scalar_lea.sflag [#allocation3], %s234
        %s236 = sand.u32 %s31, 1
        %s237 = smul.addr %s236, 8
        %s238 = scalar_lea.vmem [#allocation2], %s237
        // Predicated region
        $region45: #{tpu_custom_call.1} parent=43 // pred_check
          %p239 = pneg %p44
        $region46: #{tpu_custom_call.1} parent=43 // pred_check_branch
          %241 = sbr.rel (%p239) target = $region48
        $region47: #{tpu_custom_call.1} parent=43 // pred_region
          %242 = dma.done %s235, 128
        $region48: #{tpu_custom_call.1} parent=43 // pred_fallthru
          _
        %s243 = sand.u32 %s31, 1
        %s244 = scalar_lea.sflag [#allocation3], %s243
        %s245 = sand.u32 %s31, 1
        %s246 = smul.addr %s245, 8
        %s247 = scalar_lea.vmem [#allocation2], %s246
        %p248 = pneg %p44
        %p249 = pneg %p41
        %p250 = pneg %p65
        %p251 = pneg %p62
        %p252 = pneg %p86
        %p253 = pneg %p83
        %p254 = pneg %p107
        %p255 = pneg %p104
        %p256 = pneg %p128
        %p257 = pneg %p125
        %p258 = pneg %p149
        %p259 = pneg %p146
        %p260 = pneg %p175
        %p261 = pneg %p172
        %s262 = sand.u32 %s162, 1
        %s263 = scalar_lea.sflag [#allocation4], %s262
        %s264 = sand.u32 %s162, 1
        %s265 = smul.addr %s264, 8
        %s266 = scalar_lea.vmem [#allocation5], %s265
        %v267 = vld [vmem:[%s238] sm:$0xff]
        %v268 = vld [vmem:[%s5] sm:$0xff]
        %vm269 = vcmask 261120
        %v270 = vsel %vm269, %v267, 0.0
        %271 = vadd.xlane.f32.xlu0 %v270
        %v272 = vpop.xlane.xlu0 %271
        %v273 = vrcp.pop 32.0
        %v274 = vmul.f32 %v272, %v273
        %v275 = vsub.f32 %v267, %v274
        %v276 = vmul.f32 %v275, %v275
        %v277 = vsel %vm269, %v276, 0.0
        %278 = vadd.xlane.f32.xlu0 %v277
        %v279 = vpop.xlane.xlu0 %278
        %v280 = vmul.f32 %v279, %v273
        %v281 = vadd.f32 %v280, 1e-06
        %v282 = vrsqrt.pop %v281
        %v283 = vmul.f32 %v275, %v282
        %v284 = vlaneseq
        %v285 = vshrl.u32 %v284, 7
        %v286 = vsub.s32 0, %v285
        %v287 = vrot.slane %v268, %v286
        %v288 = vmul.f32 %v283, %v287
        %v289 = vlaneseq
        %v290 = vshrl.u32 %v289, 7
        %v291 = vsub.s32 1, %v290
        %v292 = vrot.slane %v268, %v291
        %v293 = vadd.f32 %v288, %v292
        %v294 = vld [vmem:[%s1] sm:$0xff]
        %v295 = vld [vmem:[%s1 + $0x8] sm:$0xff]
        %v296 = vld [vmem:[%s1 + $0x10] sm:$0xff]
        %v297 = vld [vmem:[%s1 + $0x18] sm:$0xff]
        %v298 = vlaneseq
        %v299 = vshrl.u32 %v298, 7
        %v300 = vsub.s32 4, %v299
        %v301 = vrot.slane %v268, %v300
        %v303 = vsel %vm269, %v293, 0
        %305 = vmatprep.subr.mxu0 0.0
        %306 = vmatpush1.msra.mxu0 0.0
        %307 = vmatprep.subr.mxu0 0.0
        %308 = vmatpush1.msra.mxu0 0.0
        %309 = vmatprep.subr.mxu0 0.0
        %310 = vmatpush1.msra.mxu0 0.0
        %311 = vmatprep.subr.mxu0 0.0
        %312 = vmatpush1.msra.mxu0 0.0
        %313 = vmatprep.subr.mxu0 0.0
        %314 = vmatpush1.msra.mxu0 0.0
        %315 = vmatprep.subr.mxu0 0.0
        %316 = vmatpush1.msra.mxu0 0.0
        %317 = vmatprep.subr.mxu0 0.0
        %318 = vmatpush1.msra.mxu0 0.0
        %319 = vmatprep.subr.mxu0 0.0
        %320 = vmatpush1.msra.mxu0 0.0
        %321 = vmatprep.subr.mxu0 0.0
        %322 = vmatpush1.msra.mxu0 0.0
        %323 = vmatprep.subr.mxu0 0.0
        %324 = vmatpush1.msra.mxu0 0.0
        %325 = vmatprep.subr.mxu0 0.0
        %326 = vmatpush1.msra.mxu0 0.0
        %327 = vmatprep.subr.mxu0 0.0
        %328 = vmatpush1.msra.mxu0 0.0
        %329 = vmatprep.subr.mxu0 0.0
        %330 = vmatpush1.msra.mxu0 %v297
        %331 = vmatprep.subr.mxu0 0.0
        %332 = vmatpush1.msra.mxu0 %v296
        %333 = vmatprep.subr.mxu0 0.0
        %334 = vmatpush1.msra.mxu0 %v295
        %335 = vmatprep.subr.mxu0 0.0
        %336 = vmatpush1.msra.mxu0 %v294
        %337 = vmatprep.subr.mxu0 0.0
        %338 = vmatpush2.msra.mxu0 0.0
        %339 = vmatprep.subr.mxu0 0.0
        %340 = vmatpush2.msra.mxu0 0.0
        %341 = vmatprep.subr.mxu0 0.0
        %342 = vmatpush2.msra.mxu0 0.0
        %343 = vmatprep.subr.mxu0 0.0
        %344 = vmatpush2.msra.mxu0 0.0
        %345 = vmatprep.subr.mxu0 0.0
        %346 = vmatpush2.msra.mxu0 0.0
        %347 = vmatprep.subr.mxu0 0.0
        %348 = vmatpush2.msra.mxu0 0.0
        %349 = vmatprep.subr.mxu0 0.0
        %350 = vmatpush2.msra.mxu0 0.0
        %351 = vmatprep.subr.mxu0 0.0
        %352 = vmatpush2.msra.mxu0 0.0
        %353 = vmatprep.subr.mxu0 0.0
        %354 = vmatpush2.msra.mxu0 0.0
        %355 = vmatprep.subr.mxu0 0.0
        %356 = vmatpush2.msra.mxu0 0.0
        %357 = vmatprep.subr.mxu0 0.0
        %358 = vmatpush2.msra.mxu0 0.0
        %359 = vmatprep.subr.mxu0 0.0
        %360 = vmatpush2.msra.mxu0 0.0
        %361 = vmatprep.subr.mxu0 0.0
        %362 = vmatpush2.msra.mxu0 0.0
        %363 = vmatprep.subr.mxu0 0.0
        %364 = vmatpush2.msra.mxu0 0.0
        %365 = vmatprep.subr.mxu0 0.0
        %366 = vmatpush2.msra.mxu0 0.0
        %367 = vmatprep.subr.mxu0 0.0
        %368 = vmatpush2.msra.mxu0 0.0
        %369 = vmatprep.mubr.f32.mxu0 0.0
        %370 = vmatmul.mubr.f32.gmra.mxu0 %v303
        %v371 = vpop.f32.mrf.mxu0
        %v372 = vadd.f32 %v301, %v371
        %v373 = vpop.f32.mrf.mxu0
        %374 = vdwg.mxu0
        %376 = vrot.lane.b32.xlu0 %v372, 120
        %v377 = vpop.permute.xlu0 %376
        %378 = vrot.lane.b32.xlu0 %v372, 112
        %v379 = vpop.permute.xlu0 %378
        %380 = vrot.lane.b32.xlu0 %v372, 104
        %v381 = vpop.permute.xlu0 %380
        %382 = vrot.lane.b32.xlu0 %v372, 96
        %v383 = vpop.permute.xlu0 %382
        %vm384 = vcmask 64512
        %v385 = vsel %vm384, %v372, 0
        %v387 = vsel %vm384, %v383, 0
        %389 = vmatprep.subr.mxu0 0.0
        %390 = vmatpush1.xpose.msra.mxu0 0.0
        %391 = vmatprep.subr.mxu0 0.0
        %392 = vmatpush1.xpose.msra.mxu0 0.0
        %393 = vmatprep.subr.mxu0 0.0
        %394 = vmatpush1.xpose.msra.mxu0 0.0
        %395 = vmatprep.subr.mxu0 0.0
        %396 = vmatpush1.xpose.msra.mxu0 0.0
        %397 = vmatprep.subr.mxu0 0.0
        %398 = vmatpush1.xpose.msra.mxu0 0.0
        %399 = vmatprep.subr.mxu0 0.0
        %400 = vmatpush1.xpose.msra.mxu0 0.0
        %401 = vmatprep.subr.mxu0 0.0
        %402 = vmatpush1.xpose.msra.mxu0 0.0
        %403 = vmatprep.subr.mxu0 0.0
        %404 = vmatpush1.xpose.msra.mxu0 0.0
        %405 = vmatprep.subr.mxu0 0.0
        %406 = vmatpush1.xpose.msra.mxu0 0.0
        %407 = vmatprep.subr.mxu0 0.0
        %408 = vmatpush1.xpose.msra.mxu0 0.0
        %409 = vmatprep.subr.mxu0 0.0
        %410 = vmatpush1.xpose.msra.mxu0 0.0
        %411 = vmatprep.subr.mxu0 0.0
        %412 = vmatpush1.xpose.msra.mxu0 0.0
        %413 = vmatprep.subr.mxu0 0.0
        %414 = vmatpush1.xpose.msra.mxu0 0.0
        %415 = vmatprep.subr.mxu0 0.0
        %416 = vmatpush1.xpose.msra.mxu0 0.0
        %417 = vmatprep.subr.mxu0 0.0
        %418 = vmatpush1.xpose.msra.mxu0 0.0
        %419 = vmatprep.subr.mxu0 0.0
        %420 = vmatpush1.xpose.msra.mxu0 %v387
        %421 = vmatprep.subr.mxu0 0.0
        %422 = vmatpush2.xpose.msra.mxu0 0.0
        %423 = vmatprep.subr.mxu0 0.0
        %424 = vmatpush2.xpose.msra.mxu0 0.0
        %425 = vmatprep.subr.mxu0 0.0
        %426 = vmatpush2.xpose.msra.mxu0 0.0
        %427 = vmatprep.subr.mxu0 0.0
        %428 = vmatpush2.xpose.msra.mxu0 0.0
        %429 = vmatprep.subr.mxu0 0.0
        %430 = vmatpush2.xpose.msra.mxu0 0.0
        %431 = vmatprep.subr.mxu0 0.0
        %432 = vmatpush2.xpose.msra.mxu0 0.0
        %433 = vmatprep.subr.mxu0 0.0
        %434 = vmatpush2.xpose.msra.mxu0 0.0
        %435 = vmatprep.subr.mxu0 0.0
        %436 = vmatpush2.xpose.msra.mxu0 0.0
        %437 = vmatprep.subr.mxu0 0.0
        %438 = vmatpush2.xpose.msra.mxu0 0.0
        %439 = vmatprep.subr.mxu0 0.0
        %440 = vmatpush2.xpose.msra.mxu0 0.0
        %441 = vmatprep.subr.mxu0 0.0
        %442 = vmatpush2.xpose.msra.mxu0 0.0
        %443 = vmatprep.subr.mxu0 0.0
        %444 = vmatpush2.xpose.msra.mxu0 0.0
        %445 = vmatprep.subr.mxu0 0.0
        %446 = vmatpush2.xpose.msra.mxu0 0.0
        %447 = vmatprep.subr.mxu0 0.0
        %448 = vmatpush2.xpose.msra.mxu0 0.0
        %449 = vmatprep.subr.mxu0 0.0
        %450 = vmatpush2.xpose.msra.mxu0 0.0
        %451 = vmatprep.subr.mxu0 0.0
        %452 = vmatpush2.xpose.msra.mxu0 0.0
        %453 = vmatprep.mubr.f32.mxu0 0.0
        %454 = vmatmul.mubr.f32.gmra.mxu0 %v385
        %v455 = vpop.f32.mrf.mxu0
        %v456 = vadd.f32 0.0, %v455
        %v457 = vpop.f32.mrf.mxu0
        %458 = vdwg.mxu0
        %459 = vrot.lane.b32.xlu0 %v377, 96
        %v460 = vpop.permute.xlu0 %459
        %v461 = vsel %vm384, %v377, 0
        %v463 = vsel %vm384, %v460, 0
        %465 = vmatprep.subr.mxu0 0.0
        %466 = vmatpush1.xpose.msra.mxu0 0.0
        %467 = vmatprep.subr.mxu0 0.0
        %468 = vmatpush1.xpose.msra.mxu0 0.0
        %469 = vmatprep.subr.mxu0 0.0
        %470 = vmatpush1.xpose.msra.mxu0 0.0
        %471 = vmatprep.subr.mxu0 0.0
        %472 = vmatpush1.xpose.msra.mxu0 0.0
        %473 = vmatprep.subr.mxu0 0.0
        %474 = vmatpush1.xpose.msra.mxu0 0.0
        %475 = vmatprep.subr.mxu0 0.0
        %476 = vmatpush1.xpose.msra.mxu0 0.0
        %477 = vmatprep.subr.mxu0 0.0
        %478 = vmatpush1.xpose.msra.mxu0 0.0
        %479 = vmatprep.subr.mxu0 0.0
        %480 = vmatpush1.xpose.msra.mxu0 0.0
        %481 = vmatprep.subr.mxu0 0.0
        %482 = vmatpush1.xpose.msra.mxu0 0.0
        %483 = vmatprep.subr.mxu0 0.0
        %484 = vmatpush1.xpose.msra.mxu0 0.0
        %485 = vmatprep.subr.mxu0 0.0
        %486 = vmatpush1.xpose.msra.mxu0 0.0
        %487 = vmatprep.subr.mxu0 0.0
        %488 = vmatpush1.xpose.msra.mxu0 0.0
        %489 = vmatprep.subr.mxu0 0.0
        %490 = vmatpush1.xpose.msra.mxu0 0.0
        %491 = vmatprep.subr.mxu0 0.0
        %492 = vmatpush1.xpose.msra.mxu0 0.0
        %493 = vmatprep.subr.mxu0 0.0
        %494 = vmatpush1.xpose.msra.mxu0 0.0
        %495 = vmatprep.subr.mxu0 0.0
        %496 = vmatpush1.xpose.msra.mxu0 %v463
        %497 = vmatprep.subr.mxu0 0.0
        %498 = vmatpush2.xpose.msra.mxu0 0.0
        %499 = vmatprep.subr.mxu0 0.0
        %500 = vmatpush2.xpose.msra.mxu0 0.0
        %501 = vmatprep.subr.mxu0 0.0
        %502 = vmatpush2.xpose.msra.mxu0 0.0
        %503 = vmatprep.subr.mxu0 0.0
        %504 = vmatpush2.xpose.msra.mxu0 0.0
        %505 = vmatprep.subr.mxu0 0.0
        %506 = vmatpush2.xpose.msra.mxu0 0.0
        %507 = vmatprep.subr.mxu0 0.0
        %508 = vmatpush2.xpose.msra.mxu0 0.0
        %509 = vmatprep.subr.mxu0 0.0
        %510 = vmatpush2.xpose.msra.mxu0 0.0
        %511 = vmatprep.subr.mxu0 0.0
        %512 = vmatpush2.xpose.msra.mxu0 0.0
        %513 = vmatprep.subr.mxu0 0.0
        %514 = vmatpush2.xpose.msra.mxu0 0.0
        %515 = vmatprep.subr.mxu0 0.0
        %516 = vmatpush2.xpose.msra.mxu0 0.0
        %517 = vmatprep.subr.mxu0 0.0
        %518 = vmatpush2.xpose.msra.mxu0 0.0
        %519 = vmatprep.subr.mxu0 0.0
        %520 = vmatpush2.xpose.msra.mxu0 0.0
        %521 = vmatprep.subr.mxu0 0.0
        %522 = vmatpush2.xpose.msra.mxu0 0.0
        %523 = vmatprep.subr.mxu0 0.0
        %524 = vmatpush2.xpose.msra.mxu0 0.0
        %525 = vmatprep.subr.mxu0 0.0
        %526 = vmatpush2.xpose.msra.mxu0 0.0
        %527 = vmatprep.subr.mxu0 0.0
        %528 = vmatpush2.xpose.msra.mxu0 0.0
        %529 = vmatprep.mubr.f32.mxu0 0.0
        %530 = vmatmul.mubr.f32.gmra.mxu0 %v461
        %v531 = vpop.f32.mrf.mxu0
        %v532 = vadd.f32 0.0, %v531
        %v533 = vpop.f32.mrf.mxu0
        %534 = vdwg.mxu0
        %535 = vrot.lane.b32.xlu0 %v379, 96
        %v536 = vpop.permute.xlu0 %535
        %v537 = vsel %vm384, %v379, 0
        %v539 = vsel %vm384, %v536, 0
        %541 = vmatprep.subr.mxu0 0.0
        %542 = vmatpush1.xpose.msra.mxu0 0.0
        %543 = vmatprep.subr.mxu0 0.0
        %544 = vmatpush1.xpose.msra.mxu0 0.0
        %545 = vmatprep.subr.mxu0 0.0
        %546 = vmatpush1.xpose.msra.mxu0 0.0
        %547 = vmatprep.subr.mxu0 0.0
        %548 = vmatpush1.xpose.msra.mxu0 0.0
        %549 = vmatprep.subr.mxu0 0.0
        %550 = vmatpush1.xpose.msra.mxu0 0.0
        %551 = vmatprep.subr.mxu0 0.0
        %552 = vmatpush1.xpose.msra.mxu0 0.0
        %553 = vmatprep.subr.mxu0 0.0
        %554 = vmatpush1.xpose.msra.mxu0 0.0
        %555 = vmatprep.subr.mxu0 0.0
        %556 = vmatpush1.xpose.msra.mxu0 0.0
        %557 = vmatprep.subr.mxu0 0.0
        %558 = vmatpush1.xpose.msra.mxu0 0.0
        %559 = vmatprep.subr.mxu0 0.0
        %560 = vmatpush1.xpose.msra.mxu0 0.0
        %561 = vmatprep.subr.mxu0 0.0
        %562 = vmatpush1.xpose.msra.mxu0 0.0
        %563 = vmatprep.subr.mxu0 0.0
        %564 = vmatpush1.xpose.msra.mxu0 0.0
        %565 = vmatprep.subr.mxu0 0.0
        %566 = vmatpush1.xpose.msra.mxu0 0.0
        %567 = vmatprep.subr.mxu0 0.0
        %568 = vmatpush1.xpose.msra.mxu0 0.0
        %569 = vmatprep.subr.mxu0 0.0
        %570 = vmatpush1.xpose.msra.mxu0 0.0
        %571 = vmatprep.subr.mxu0 0.0
        %572 = vmatpush1.xpose.msra.mxu0 %v539
        %573 = vmatprep.subr.mxu0 0.0
        %574 = vmatpush2.xpose.msra.mxu0 0.0
        %575 = vmatprep.subr.mxu0 0.0
        %576 = vmatpush2.xpose.msra.mxu0 0.0
        %577 = vmatprep.subr.mxu0 0.0
        %578 = vmatpush2.xpose.msra.mxu0 0.0
        %579 = vmatprep.subr.mxu0 0.0
        %580 = vmatpush2.xpose.msra.mxu0 0.0
        %581 = vmatprep.subr.mxu0 0.0
        %582 = vmatpush2.xpose.msra.mxu0 0.0
        %583 = vmatprep.subr.mxu0 0.0
        %584 = vmatpush2.xpose.msra.mxu0 0.0
        %585 = vmatprep.subr.mxu0 0.0
        %586 = vmatpush2.xpose.msra.mxu0 0.0
        %587 = vmatprep.subr.mxu0 0.0
        %588 = vmatpush2.xpose.msra.mxu0 0.0
        %589 = vmatprep.subr.mxu0 0.0
        %590 = vmatpush2.xpose.msra.mxu0 0.0
        %591 = vmatprep.subr.mxu0 0.0
        %592 = vmatpush2.xpose.msra.mxu0 0.0
        %593 = vmatprep.subr.mxu0 0.0
        %594 = vmatpush2.xpose.msra.mxu0 0.0
        %595 = vmatprep.subr.mxu0 0.0
        %596 = vmatpush2.xpose.msra.mxu0 0.0
        %597 = vmatprep.subr.mxu0 0.0
        %598 = vmatpush2.xpose.msra.mxu0 0.0
        %599 = vmatprep.subr.mxu0 0.0
        %600 = vmatpush2.xpose.msra.mxu0 0.0
        %601 = vmatprep.subr.mxu0 0.0
        %602 = vmatpush2.xpose.msra.mxu0 0.0
        %603 = vmatprep.subr.mxu0 0.0
        %604 = vmatpush2.xpose.msra.mxu0 0.0
        %605 = vmatprep.mubr.f32.mxu0 0.0
        %606 = vmatmul.mubr.f32.gmra.mxu0 %v537
        %v607 = vpop.f32.mrf.mxu0
        %v608 = vadd.f32 0.0, %v607
        %v609 = vpop.f32.mrf.mxu0
        %610 = vdwg.mxu0
        %611 = vrot.lane.b32.xlu0 %v381, 96
        %v612 = vpop.permute.xlu0 %611
        %v613 = vsel %vm384, %v381, 0
        %v615 = vsel %vm384, %v612, 0
        %617 = vmatprep.subr.mxu0 0.0
        %618 = vmatpush1.xpose.msra.mxu0 0.0
        %619 = vmatprep.subr.mxu0 0.0
        %620 = vmatpush1.xpose.msra.mxu0 0.0
        %621 = vmatprep.subr.mxu0 0.0
        %622 = vmatpush1.xpose.msra.mxu0 0.0
        %623 = vmatprep.subr.mxu0 0.0
        %624 = vmatpush1.xpose.msra.mxu0 0.0
        %625 = vmatprep.subr.mxu0 0.0
        %626 = vmatpush1.xpose.msra.mxu0 0.0
        %627 = vmatprep.subr.mxu0 0.0
        %628 = vmatpush1.xpose.msra.mxu0 0.0
        %629 = vmatprep.subr.mxu0 0.0
        %630 = vmatpush1.xpose.msra.mxu0 0.0
        %631 = vmatprep.subr.mxu0 0.0
        %632 = vmatpush1.xpose.msra.mxu0 0.0
        %633 = vmatprep.subr.mxu0 0.0
        %634 = vmatpush1.xpose.msra.mxu0 0.0
        %635 = vmatprep.subr.mxu0 0.0
        %636 = vmatpush1.xpose.msra.mxu0 0.0
        %637 = vmatprep.subr.mxu0 0.0
        %638 = vmatpush1.xpose.msra.mxu0 0.0
        %639 = vmatprep.subr.mxu0 0.0
        %640 = vmatpush1.xpose.msra.mxu0 0.0
        %641 = vmatprep.subr.mxu0 0.0
        %642 = vmatpush1.xpose.msra.mxu0 0.0
        %643 = vmatprep.subr.mxu0 0.0
        %644 = vmatpush1.xpose.msra.mxu0 0.0
        %645 = vmatprep.subr.mxu0 0.0
        %646 = vmatpush1.xpose.msra.mxu0 0.0
        %647 = vmatprep.subr.mxu0 0.0
        %648 = vmatpush1.xpose.msra.mxu0 %v615
        %649 = vmatprep.subr.mxu0 0.0
        %650 = vmatpush2.xpose.msra.mxu0 0.0
        %651 = vmatprep.subr.mxu0 0.0
        %652 = vmatpush2.xpose.msra.mxu0 0.0
        %653 = vmatprep.subr.mxu0 0.0
        %654 = vmatpush2.xpose.msra.mxu0 0.0
        %655 = vmatprep.subr.mxu0 0.0
        %656 = vmatpush2.xpose.msra.mxu0 0.0
        %657 = vmatprep.subr.mxu0 0.0
        %658 = vmatpush2.xpose.msra.mxu0 0.0
        %659 = vmatprep.subr.mxu0 0.0
        %660 = vmatpush2.xpose.msra.mxu0 0.0
        %661 = vmatprep.subr.mxu0 0.0
        %662 = vmatpush2.xpose.msra.mxu0 0.0
        %663 = vmatprep.subr.mxu0 0.0
        %664 = vmatpush2.xpose.msra.mxu0 0.0
        %665 = vmatprep.subr.mxu0 0.0
        %666 = vmatpush2.xpose.msra.mxu0 0.0
        %667 = vmatprep.subr.mxu0 0.0
        %668 = vmatpush2.xpose.msra.mxu0 0.0
        %669 = vmatprep.subr.mxu0 0.0
        %670 = vmatpush2.xpose.msra.mxu0 0.0
        %671 = vmatprep.subr.mxu0 0.0
        %672 = vmatpush2.xpose.msra.mxu0 0.0
        %673 = vmatprep.subr.mxu0 0.0
        %674 = vmatpush2.xpose.msra.mxu0 0.0
        %675 = vmatprep.subr.mxu0 0.0
        %676 = vmatpush2.xpose.msra.mxu0 0.0
        %677 = vmatprep.subr.mxu0 0.0
        %678 = vmatpush2.xpose.msra.mxu0 0.0
        %679 = vmatprep.subr.mxu0 0.0
        %680 = vmatpush2.xpose.msra.mxu0 0.0
        %681 = vmatprep.mubr.f32.mxu0 0.0
        %682 = vmatmul.mubr.f32.gmra.mxu0 %v613
        %v683 = vpop.f32.mrf.mxu0
        %v684 = vadd.f32 0.0, %v683
        %v685 = vpop.f32.mrf.mxu0
        %686 = vdwg.mxu0
        %v687 = vsel %vm384, %v456, -inf
        %688 = vmax.xlane.f32.xlu0 %v687
        %v689 = vpop.xlane.xlu0 %688
        %v690 = vsel %vm384, %v532, -inf
        %691 = vmax.xlane.f32.xlu0 %v690
        %v692 = vpop.xlane.xlu0 %691
        %v693 = vsel %vm384, %v608, -inf
        %694 = vmax.xlane.f32.xlu0 %v693
        %v695 = vpop.xlane.xlu0 %694
        %v696 = vsel %vm384, %v684, -inf
        %697 = vmax.xlane.f32.xlu0 %v696
        %v698 = vpop.xlane.xlu0 %697
        %v699 = vsub.f32 %v456, %v689
        %v700 = vsub.f32 %v532, %v692
        %v701 = vsub.f32 %v608, %v695
        %v702 = vsub.f32 %v684, %v698
        %v703 = vmul.f32 %v699, 1.442695
        %v704 = vpow.pop %v703
        %v705 = vmul.f32 %v700, 1.442695
        %v706 = vpow.pop %v705
        %v707 = vmul.f32 %v701, 1.442695
        %v708 = vpow.pop %v707
        %v709 = vmul.f32 %v702, 1.442695
        %v710 = vpow.pop %v709
        %v711 = vsel %vm384, %v704, 0.0
        %712 = vadd.xlane.f32.xlu0 %v711
        %v713 = vpop.xlane.xlu0 %712
        %v714 = vsel %vm384, %v706, 0.0
        %715 = vadd.xlane.f32.xlu0 %v714
        %v716 = vpop.xlane.xlu0 %715
        %v717 = vsel %vm384, %v708, 0.0
        %718 = vadd.xlane.f32.xlu0 %v717
        %v719 = vpop.xlane.xlu0 %718
        %v720 = vsel %vm384, %v710, 0.0
        %721 = vadd.xlane.f32.xlu0 %v720
        %v722 = vpop.xlane.xlu0 %721
        %v723 = vrcp.pop %v713
        %v724 = vmul.f32 1.0, %v723
        %v725 = vrcp.pop %v716
        %v726 = vmul.f32 1.0, %v725
        %v727 = vrcp.pop %v719
        %v728 = vmul.f32 1.0, %v727
        %v729 = vrcp.pop %v722
        %v730 = vmul.f32 1.0, %v729
        %v731 = vmul.f32 %v704, %v724
        %v732 = vmul.f32 %v706, %v726
        %v733 = vmul.f32 %v708, %v728
        %v734 = vmul.f32 %v710, %v730
        %735 = vrot.lane.b32.xlu0 %v372, 64
        %v736 = vpop.permute.xlu0 %735
        %v739 = vsel %vm384, %v731, 0
        %741 = vmatprep.subr.mxu0 0.0
        %742 = vmatpush1.msra.mxu0 0.0
        %743 = vmatprep.subr.mxu0 0.0
        %744 = vmatpush1.msra.mxu0 0.0
        %745 = vmatprep.subr.mxu0 0.0
        %746 = vmatpush1.msra.mxu0 0.0
        %747 = vmatprep.subr.mxu0 0.0
        %748 = vmatpush1.msra.mxu0 0.0
        %749 = vmatprep.subr.mxu0 0.0
        %750 = vmatpush1.msra.mxu0 0.0
        %751 = vmatprep.subr.mxu0 0.0
        %752 = vmatpush1.msra.mxu0 0.0
        %753 = vmatprep.subr.mxu0 0.0
        %754 = vmatpush1.msra.mxu0 0.0
        %755 = vmatprep.subr.mxu0 0.0
        %756 = vmatpush1.msra.mxu0 0.0
        %757 = vmatprep.subr.mxu0 0.0
        %758 = vmatpush1.msra.mxu0 0.0
        %759 = vmatprep.subr.mxu0 0.0
        %760 = vmatpush1.msra.mxu0 0.0
        %761 = vmatprep.subr.mxu0 0.0
        %762 = vmatpush1.msra.mxu0 0.0
        %763 = vmatprep.subr.mxu0 0.0
        %764 = vmatpush1.msra.mxu0 0.0
        %765 = vmatprep.subr.mxu0 0.0
        %766 = vmatpush1.msra.mxu0 0.0
        %767 = vmatprep.subr.mxu0 0.0
        %768 = vmatpush1.msra.mxu0 0.0
        %769 = vmatprep.subr.mxu0 0.0
        %770 = vmatpush1.msra.mxu0 0.0
        %771 = vmatprep.subr.mxu0 0.0
        %772 = vmatpush1.msra.mxu0 %v736
        %773 = vmatprep.subr.mxu0 0.0
        %774 = vmatpush2.msra.mxu0 0.0
        %775 = vmatprep.subr.mxu0 0.0
        %776 = vmatpush2.msra.mxu0 0.0
        %777 = vmatprep.subr.mxu0 0.0
        %778 = vmatpush2.msra.mxu0 0.0
        %779 = vmatprep.subr.mxu0 0.0
        %780 = vmatpush2.msra.mxu0 0.0
        %781 = vmatprep.subr.mxu0 0.0
        %782 = vmatpush2.msra.mxu0 0.0
        %783 = vmatprep.subr.mxu0 0.0
        %784 = vmatpush2.msra.mxu0 0.0
        %785 = vmatprep.subr.mxu0 0.0
        %786 = vmatpush2.msra.mxu0 0.0
        %787 = vmatprep.subr.mxu0 0.0
        %788 = vmatpush2.msra.mxu0 0.0
        %789 = vmatprep.subr.mxu0 0.0
        %790 = vmatpush2.msra.mxu0 0.0
        %791 = vmatprep.subr.mxu0 0.0
        %792 = vmatpush2.msra.mxu0 0.0
        %793 = vmatprep.subr.mxu0 0.0
        %794 = vmatpush2.msra.mxu0 0.0
        %795 = vmatprep.subr.mxu0 0.0
        %796 = vmatpush2.msra.mxu0 0.0
        %797 = vmatprep.subr.mxu0 0.0
        %798 = vmatpush2.msra.mxu0 0.0
        %799 = vmatprep.subr.mxu0 0.0
        %800 = vmatpush2.msra.mxu0 0.0
        %801 = vmatprep.subr.mxu0 0.0
        %802 = vmatpush2.msra.mxu0 0.0
        %803 = vmatprep.subr.mxu0 0.0
        %804 = vmatpush2.msra.mxu0 0.0
        %805 = vmatprep.mubr.f32.mxu0 0.0
        %806 = vmatmul.mubr.f32.gmra.mxu0 %v739
        %v807 = vpop.f32.mrf.mxu0
        %v808 = vadd.f32 0.0, %v807
        %v809 = vpop.f32.mrf.mxu0
        %810 = vdwg.mxu0
        %811 = vrot.lane.b32.xlu0 %v377, 64
        %v812 = vpop.permute.xlu0 %811
        %v815 = vsel %vm384, %v732, 0
        %817 = vmatprep.subr.mxu0 0.0
        %818 = vmatpush1.msra.mxu0 0.0
        %819 = vmatprep.subr.mxu0 0.0
        %820 = vmatpush1.msra.mxu0 0.0
        %821 = vmatprep.subr.mxu0 0.0
        %822 = vmatpush1.msra.mxu0 0.0
        %823 = vmatprep.subr.mxu0 0.0
        %824 = vmatpush1.msra.mxu0 0.0
        %825 = vmatprep.subr.mxu0 0.0
        %826 = vmatpush1.msra.mxu0 0.0
        %827 = vmatprep.subr.mxu0 0.0
        %828 = vmatpush1.msra.mxu0 0.0
        %829 = vmatprep.subr.mxu0 0.0
        %830 = vmatpush1.msra.mxu0 0.0
        %831 = vmatprep.subr.mxu0 0.0
        %832 = vmatpush1.msra.mxu0 0.0
        %833 = vmatprep.subr.mxu0 0.0
        %834 = vmatpush1.msra.mxu0 0.0
        %835 = vmatprep.subr.mxu0 0.0
        %836 = vmatpush1.msra.mxu0 0.0
        %837 = vmatprep.subr.mxu0 0.0
        %838 = vmatpush1.msra.mxu0 0.0
        %839 = vmatprep.subr.mxu0 0.0
        %840 = vmatpush1.msra.mxu0 0.0
        %841 = vmatprep.subr.mxu0 0.0
        %842 = vmatpush1.msra.mxu0 0.0
        %843 = vmatprep.subr.mxu0 0.0
        %844 = vmatpush1.msra.mxu0 0.0
        %845 = vmatprep.subr.mxu0 0.0
        %846 = vmatpush1.msra.mxu0 0.0
        %847 = vmatprep.subr.mxu0 0.0
        %848 = vmatpush1.msra.mxu0 %v812
        %849 = vmatprep.subr.mxu0 0.0
        %850 = vmatpush2.msra.mxu0 0.0
        %851 = vmatprep.subr.mxu0 0.0
        %852 = vmatpush2.msra.mxu0 0.0
        %853 = vmatprep.subr.mxu0 0.0
        %854 = vmatpush2.msra.mxu0 0.0
        %855 = vmatprep.subr.mxu0 0.0
        %856 = vmatpush2.msra.mxu0 0.0
        %857 = vmatprep.subr.mxu0 0.0
        %858 = vmatpush2.msra.mxu0 0.0
        %859 = vmatprep.subr.mxu0 0.0
        %860 = vmatpush2.msra.mxu0 0.0
        %861 = vmatprep.subr.mxu0 0.0
        %862 = vmatpush2.msra.mxu0 0.0
        %863 = vmatprep.subr.mxu0 0.0
        %864 = vmatpush2.msra.mxu0 0.0
        %865 = vmatprep.subr.mxu0 0.0
        %866 = vmatpush2.msra.mxu0 0.0
        %867 = vmatprep.subr.mxu0 0.0
        %868 = vmatpush2.msra.mxu0 0.0
        %869 = vmatprep.subr.mxu0 0.0
        %870 = vmatpush2.msra.mxu0 0.0
        %871 = vmatprep.subr.mxu0 0.0
        %872 = vmatpush2.msra.mxu0 0.0
        %873 = vmatprep.subr.mxu0 0.0
        %874 = vmatpush2.msra.mxu0 0.0
        %875 = vmatprep.subr.mxu0 0.0
        %876 = vmatpush2.msra.mxu0 0.0
        %877 = vmatprep.subr.mxu0 0.0
        %878 = vmatpush2.msra.mxu0 0.0
        %879 = vmatprep.subr.mxu0 0.0
        %880 = vmatpush2.msra.mxu0 0.0
        %881 = vmatprep.mubr.f32.mxu0 0.0
        %882 = vmatmul.mubr.f32.gmra.mxu0 %v815
        %v883 = vpop.f32.mrf.mxu0
        %v884 = vadd.f32 0.0, %v883
        %v885 = vpop.f32.mrf.mxu0
        %886 = vdwg.mxu0
        %887 = vrot.lane.b32.xlu0 %v379, 64
        %v888 = vpop.permute.xlu0 %887
        %v891 = vsel %vm384, %v733, 0
        %893 = vmatprep.subr.mxu0 0.0
        %894 = vmatpush1.msra.mxu0 0.0
        %895 = vmatprep.subr.mxu0 0.0
        %896 = vmatpush1.msra.mxu0 0.0
        %897 = vmatprep.subr.mxu0 0.0
        %898 = vmatpush1.msra.mxu0 0.0
        %899 = vmatprep.subr.mxu0 0.0
        %900 = vmatpush1.msra.mxu0 0.0
        %901 = vmatprep.subr.mxu0 0.0
        %902 = vmatpush1.msra.mxu0 0.0
        %903 = vmatprep.subr.mxu0 0.0
        %904 = vmatpush1.msra.mxu0 0.0
        %905 = vmatprep.subr.mxu0 0.0
        %906 = vmatpush1.msra.mxu0 0.0
        %907 = vmatprep.subr.mxu0 0.0
        %908 = vmatpush1.msra.mxu0 0.0
        %909 = vmatprep.subr.mxu0 0.0
        %910 = vmatpush1.msra.mxu0 0.0
        %911 = vmatprep.subr.mxu0 0.0
        %912 = vmatpush1.msra.mxu0 0.0
        %913 = vmatprep.subr.mxu0 0.0
        %914 = vmatpush1.msra.mxu0 0.0
        %915 = vmatprep.subr.mxu0 0.0
        %916 = vmatpush1.msra.mxu0 0.0
        %917 = vmatprep.subr.mxu0 0.0
        %918 = vmatpush1.msra.mxu0 0.0
        %919 = vmatprep.subr.mxu0 0.0
        %920 = vmatpush1.msra.mxu0 0.0
        %921 = vmatprep.subr.mxu0 0.0
        %922 = vmatpush1.msra.mxu0 0.0
        %923 = vmatprep.subr.mxu0 0.0
        %924 = vmatpush1.msra.mxu0 %v888
        %925 = vmatprep.subr.mxu0 0.0
        %926 = vmatpush2.msra.mxu0 0.0
        %927 = vmatprep.subr.mxu0 0.0
        %928 = vmatpush2.msra.mxu0 0.0
        %929 = vmatprep.subr.mxu0 0.0
        %930 = vmatpush2.msra.mxu0 0.0
        %931 = vmatprep.subr.mxu0 0.0
        %932 = vmatpush2.msra.mxu0 0.0
        %933 = vmatprep.subr.mxu0 0.0
        %934 = vmatpush2.msra.mxu0 0.0
        %935 = vmatprep.subr.mxu0 0.0
        %936 = vmatpush2.msra.mxu0 0.0
        %937 = vmatprep.subr.mxu0 0.0
        %938 = vmatpush2.msra.mxu0 0.0
        %939 = vmatprep.subr.mxu0 0.0
        %940 = vmatpush2.msra.mxu0 0.0
        %941 = vmatprep.subr.mxu0 0.0
        %942 = vmatpush2.msra.mxu0 0.0
        %943 = vmatprep.subr.mxu0 0.0
        %944 = vmatpush2.msra.mxu0 0.0
        %945 = vmatprep.subr.mxu0 0.0
        %946 = vmatpush2.msra.mxu0 0.0
        %947 = vmatprep.subr.mxu0 0.0
        %948 = vmatpush2.msra.mxu0 0.0
        %949 = vmatprep.subr.mxu0 0.0
        %950 = vmatpush2.msra.mxu0 0.0
        %951 = vmatprep.subr.mxu0 0.0
        %952 = vmatpush2.msra.mxu0 0.0
        %953 = vmatprep.subr.mxu0 0.0
        %954 = vmatpush2.msra.mxu0 0.0
        %955 = vmatprep.subr.mxu0 0.0
        %956 = vmatpush2.msra.mxu0 0.0
        %957 = vmatprep.mubr.f32.mxu0 0.0
        %958 = vmatmul.mubr.f32.gmra.mxu0 %v891
        %v959 = vpop.f32.mrf.mxu0
        %v960 = vadd.f32 0.0, %v959
        %v961 = vpop.f32.mrf.mxu0
        %962 = vdwg.mxu0
        %963 = vrot.lane.b32.xlu0 %v381, 64
        %v964 = vpop.permute.xlu0 %963
        %v967 = vsel %vm384, %v734, 0
        %969 = vmatprep.subr.mxu0 0.0
        %970 = vmatpush1.msra.mxu0 0.0
        %971 = vmatprep.subr.mxu0 0.0
        %972 = vmatpush1.msra.mxu0 0.0
        %973 = vmatprep.subr.mxu0 0.0
        %974 = vmatpush1.msra.mxu0 0.0
        %975 = vmatprep.subr.mxu0 0.0
        %976 = vmatpush1.msra.mxu0 0.0
        %977 = vmatprep.subr.mxu0 0.0
        %978 = vmatpush1.msra.mxu0 0.0
        %979 = vmatprep.subr.mxu0 0.0
        %980 = vmatpush1.msra.mxu0 0.0
        %981 = vmatprep.subr.mxu0 0.0
        %982 = vmatpush1.msra.mxu0 0.0
        %983 = vmatprep.subr.mxu0 0.0
        %984 = vmatpush1.msra.mxu0 0.0
        %985 = vmatprep.subr.mxu0 0.0
        %986 = vmatpush1.msra.mxu0 0.0
        %987 = vmatprep.subr.mxu0 0.0
        %988 = vmatpush1.msra.mxu0 0.0
        %989 = vmatprep.subr.mxu0 0.0
        %990 = vmatpush1.msra.mxu0 0.0
        %991 = vmatprep.subr.mxu0 0.0
        %992 = vmatpush1.msra.mxu0 0.0
        %993 = vmatprep.subr.mxu0 0.0
        %994 = vmatpush1.msra.mxu0 0.0
        %995 = vmatprep.subr.mxu0 0.0
        %996 = vmatpush1.msra.mxu0 0.0
        %997 = vmatprep.subr.mxu0 0.0
        %998 = vmatpush1.msra.mxu0 0.0
        %999 = vmatprep.subr.mxu0 0.0
        %1000 = vmatpush1.msra.mxu0 %v964
        %1001 = vmatprep.subr.mxu0 0.0
        %1002 = vmatpush2.msra.mxu0 0.0
        %1003 = vmatprep.subr.mxu0 0.0
        %1004 = vmatpush2.msra.mxu0 0.0
        %1005 = vmatprep.subr.mxu0 0.0
        %1006 = vmatpush2.msra.mxu0 0.0
        %1007 = vmatprep.subr.mxu0 0.0
        %1008 = vmatpush2.msra.mxu0 0.0
        %1009 = vmatprep.subr.mxu0 0.0
        %1010 = vmatpush2.msra.mxu0 0.0
        %1011 = vmatprep.subr.mxu0 0.0
        %1012 = vmatpush2.msra.mxu0 0.0
        %1013 = vmatprep.subr.mxu0 0.0
        %1014 = vmatpush2.msra.mxu0 0.0
        %1015 = vmatprep.subr.mxu0 0.0
        %1016 = vmatpush2.msra.mxu0 0.0
        %1017 = vmatprep.subr.mxu0 0.0
        %1018 = vmatpush2.msra.mxu0 0.0
        %1019 = vmatprep.subr.mxu0 0.0
        %1020 = vmatpush2.msra.mxu0 0.0
        %1021 = vmatprep.subr.mxu0 0.0
        %1022 = vmatpush2.msra.mxu0 0.0
        %1023 = vmatprep.subr.mxu0 0.0
        %1024 = vmatpush2.msra.mxu0 0.0
        %1025 = vmatprep.subr.mxu0 0.0
        %1026 = vmatpush2.msra.mxu0 0.0
        %1027 = vmatprep.subr.mxu0 0.0
        %1028 = vmatpush2.msra.mxu0 0.0
        %1029 = vmatprep.subr.mxu0 0.0
        %1030 = vmatpush2.msra.mxu0 0.0
        %1031 = vmatprep.subr.mxu0 0.0
        %1032 = vmatpush2.msra.mxu0 0.0
        %1033 = vmatprep.mubr.f32.mxu0 0.0
        %1034 = vmatmul.mubr.f32.gmra.mxu0 %v967
        %v1035 = vpop.f32.mrf.mxu0
        %v1036 = vadd.f32 0.0, %v1035
        %v1037 = vpop.f32.mrf.mxu0
        %1038 = vdwg.mxu0
        %1040 = vrot.lane.b32.xlu0 %v884, 8
        %v1041 = vpop.permute.xlu0 %1040
        %1044 = vrot.lane.b32.xlu0 %v960, 16
        %v1045 = vpop.permute.xlu0 %1044
        %1048 = vrot.lane.b32.xlu0 %v1036, 24
        %v1049 = vpop.permute.xlu0 %1048
        %v1051 = vsel %vm384, %v808, %v1041
        %vm1052 = vcmask 130048
        %v1053 = vsel %vm1052, %v1051, %v1045
        %vm1054 = vcmask 195584
        %v1055 = vsel %vm1054, %v1053, %v1049
        %v1056 = vld [vmem:[%s2] sm:$0xff]
        %v1057 = vld [vmem:[%s2 + $0x8] sm:$0xff]
        %v1058 = vld [vmem:[%s2 + $0x10] sm:$0xff]
        %v1059 = vld [vmem:[%s2 + $0x18] sm:$0xff]
        %v1060 = vlaneseq
        %v1061 = vshrl.u32 %v1060, 7
        %v1062 = vsub.s32 5, %v1061
        %v1063 = vrot.slane %v268, %v1062
        %v1065 = vsel %vm269, %v1055, 0
        %1067 = vmatprep.subr.mxu0 0.0
        %1068 = vmatpush1.msra.mxu0 0.0
        %1069 = vmatprep.subr.mxu0 0.0
        %1070 = vmatpush1.msra.mxu0 0.0
        %1071 = vmatprep.subr.mxu0 0.0
        %1072 = vmatpush1.msra.mxu0 0.0
        %1073 = vmatprep.subr.mxu0 0.0
        %1074 = vmatpush1.msra.mxu0 0.0
        %1075 = vmatprep.subr.mxu0 0.0
        %1076 = vmatpush1.msra.mxu0 0.0
        %1077 = vmatprep.subr.mxu0 0.0
        %1078 = vmatpush1.msra.mxu0 0.0
        %1079 = vmatprep.subr.mxu0 0.0
        %1080 = vmatpush1.msra.mxu0 0.0
        %1081 = vmatprep.subr.mxu0 0.0
        %1082 = vmatpush1.msra.mxu0 0.0
        %1083 = vmatprep.subr.mxu0 0.0
        %1084 = vmatpush1.msra.mxu0 0.0
        %1085 = vmatprep.subr.mxu0 0.0
        %1086 = vmatpush1.msra.mxu0 0.0
        %1087 = vmatprep.subr.mxu0 0.0
        %1088 = vmatpush1.msra.mxu0 0.0
        %1089 = vmatprep.subr.mxu0 0.0
        %1090 = vmatpush1.msra.mxu0 0.0
        %1091 = vmatprep.subr.mxu0 0.0
        %1092 = vmatpush1.msra.mxu0 %v1059
        %1093 = vmatprep.subr.mxu0 0.0
        %1094 = vmatpush1.msra.mxu0 %v1058
        %1095 = vmatprep.subr.mxu0 0.0
        %1096 = vmatpush1.msra.mxu0 %v1057
        %1097 = vmatprep.subr.mxu0 0.0
        %1098 = vmatpush1.msra.mxu0 %v1056
        %1099 = vmatprep.subr.mxu0 0.0
        %1100 = vmatpush2.msra.mxu0 0.0
        %1101 = vmatprep.subr.mxu0 0.0
        %1102 = vmatpush2.msra.mxu0 0.0
        %1103 = vmatprep.subr.mxu0 0.0
        %1104 = vmatpush2.msra.mxu0 0.0
        %1105 = vmatprep.subr.mxu0 0.0
        %1106 = vmatpush2.msra.mxu0 0.0
        %1107 = vmatprep.subr.mxu0 0.0
        %1108 = vmatpush2.msra.mxu0 0.0
        %1109 = vmatprep.subr.mxu0 0.0
        %1110 = vmatpush2.msra.mxu0 0.0
        %1111 = vmatprep.subr.mxu0 0.0
        %1112 = vmatpush2.msra.mxu0 0.0
        %1113 = vmatprep.subr.mxu0 0.0
        %1114 = vmatpush2.msra.mxu0 0.0
        %1115 = vmatprep.subr.mxu0 0.0
        %1116 = vmatpush2.msra.mxu0 0.0
        %1117 = vmatprep.subr.mxu0 0.0
        %1118 = vmatpush2.msra.mxu0 0.0
        %1119 = vmatprep.subr.mxu0 0.0
        %1120 = vmatpush2.msra.mxu0 0.0
        %1121 = vmatprep.subr.mxu0 0.0
        %1122 = vmatpush2.msra.mxu0 0.0
        %1123 = vmatprep.subr.mxu0 0.0
        %1124 = vmatpush2.msra.mxu0 0.0
        %1125 = vmatprep.subr.mxu0 0.0
        %1126 = vmatpush2.msra.mxu0 0.0
        %1127 = vmatprep.subr.mxu0 0.0
        %1128 = vmatpush2.msra.mxu0 0.0
        %1129 = vmatprep.subr.mxu0 0.0
        %1130 = vmatpush2.msra.mxu0 0.0
        %1131 = vmatprep.mubr.f32.mxu0 0.0
        %1132 = vmatmul.mubr.f32.gmra.mxu0 %v1065
        %v1133 = vpop.f32.mrf.mxu0
        %v1134 = vadd.f32 %v1063, %v1133
        %v1135 = vpop.f32.mrf.mxu0
        %1136 = vdwg.mxu0
        %v1137 = vadd.f32 %v267, %v1134
        %v1138 = vsel %vm269, %v1137, 0.0
        %1139 = vadd.xlane.f32.xlu0 %v1138
        %v1140 = vpop.xlane.xlu0 %1139
        %v1141 = vmul.f32 %v1140, %v273
        %v1142 = vsub.f32 %v1137, %v1141
        %v1143 = vmul.f32 %v1142, %v1142
        %v1144 = vsel %vm269, %v1143, 0.0
        %1145 = vadd.xlane.f32.xlu0 %v1144
        %v1146 = vpop.xlane.xlu0 %1145
        %v1147 = vmul.f32 %v1146, %v273
        %v1148 = vadd.f32 %v1147, 1e-06
        %v1149 = vrsqrt.pop %v1148
        %v1150 = vmul.f32 %v1142, %v1149
        %v1151 = vlaneseq
        %v1152 = vshrl.u32 %v1151, 7
        %v1153 = vsub.s32 2, %v1152
        %v1154 = vrot.slane %v268, %v1153
        %v1155 = vmul.f32 %v1150, %v1154
        %v1156 = vlaneseq
        %v1157 = vshrl.u32 %v1156, 7
        %v1158 = vsub.s32 3, %v1157
        %v1159 = vrot.slane %v268, %v1158
        %v1160 = vadd.f32 %v1155, %v1159
        %v1161 = vld [vmem:[%s3] sm:$0xff]
        %v1162 = vld [vmem:[%s3 + $0x8] sm:$0xff]
        %v1163 = vld [vmem:[%s3 + $0x10] sm:$0xff]
        %v1164 = vld [vmem:[%s3 + $0x18] sm:$0xff]
        %v1165 = vlaneseq
        %v1166 = vshrl.u32 %v1165, 7
        %v1167 = vsub.s32 6, %v1166
        %v1168 = vrot.slane %v268, %v1167
        %v1170 = vsel %vm269, %v1160, 0
        %1172 = vmatprep.subr.mxu0 0.0
        %1173 = vmatpush1.msra.mxu0 0.0
        %1174 = vmatprep.subr.mxu0 0.0
        %1175 = vmatpush1.msra.mxu0 0.0
        %1176 = vmatprep.subr.mxu0 0.0
        %1177 = vmatpush1.msra.mxu0 0.0
        %1178 = vmatprep.subr.mxu0 0.0
        %1179 = vmatpush1.msra.mxu0 0.0
        %1180 = vmatprep.subr.mxu0 0.0
        %1181 = vmatpush1.msra.mxu0 0.0
        %1182 = vmatprep.subr.mxu0 0.0
        %1183 = vmatpush1.msra.mxu0 0.0
        %1184 = vmatprep.subr.mxu0 0.0
        %1185 = vmatpush1.msra.mxu0 0.0
        %1186 = vmatprep.subr.mxu0 0.0
        %1187 = vmatpush1.msra.mxu0 0.0
        %1188 = vmatprep.subr.mxu0 0.0
        %1189 = vmatpush1.msra.mxu0 0.0
        %1190 = vmatprep.subr.mxu0 0.0
        %1191 = vmatpush1.msra.mxu0 0.0
        %1192 = vmatprep.subr.mxu0 0.0
        %1193 = vmatpush1.msra.mxu0 0.0
        %1194 = vmatprep.subr.mxu0 0.0
        %1195 = vmatpush1.msra.mxu0 0.0
        %1196 = vmatprep.subr.mxu0 0.0
        %1197 = vmatpush1.msra.mxu0 %v1164
        %1198 = vmatprep.subr.mxu0 0.0
        %1199 = vmatpush1.msra.mxu0 %v1163
        %1200 = vmatprep.subr.mxu0 0.0
        %1201 = vmatpush1.msra.mxu0 %v1162
        %1202 = vmatprep.subr.mxu0 0.0
        %1203 = vmatpush1.msra.mxu0 %v1161
        %1204 = vmatprep.subr.mxu0 0.0
        %1205 = vmatpush2.msra.mxu0 0.0
        %1206 = vmatprep.subr.mxu0 0.0
        %1207 = vmatpush2.msra.mxu0 0.0
        %1208 = vmatprep.subr.mxu0 0.0
        %1209 = vmatpush2.msra.mxu0 0.0
        %1210 = vmatprep.subr.mxu0 0.0
        %1211 = vmatpush2.msra.mxu0 0.0
        %1212 = vmatprep.subr.mxu0 0.0
        %1213 = vmatpush2.msra.mxu0 0.0
        %1214 = vmatprep.subr.mxu0 0.0
        %1215 = vmatpush2.msra.mxu0 0.0
        %1216 = vmatprep.subr.mxu0 0.0
        %1217 = vmatpush2.msra.mxu0 0.0
        %1218 = vmatprep.subr.mxu0 0.0
        %1219 = vmatpush2.msra.mxu0 0.0
        %1220 = vmatprep.subr.mxu0 0.0
        %1221 = vmatpush2.msra.mxu0 0.0
        %1222 = vmatprep.subr.mxu0 0.0
        %1223 = vmatpush2.msra.mxu0 0.0
        %1224 = vmatprep.subr.mxu0 0.0
        %1225 = vmatpush2.msra.mxu0 0.0
        %1226 = vmatprep.subr.mxu0 0.0
        %1227 = vmatpush2.msra.mxu0 0.0
        %1228 = vmatprep.subr.mxu0 0.0
        %1229 = vmatpush2.msra.mxu0 0.0
        %1230 = vmatprep.subr.mxu0 0.0
        %1231 = vmatpush2.msra.mxu0 0.0
        %1232 = vmatprep.subr.mxu0 0.0
        %1233 = vmatpush2.msra.mxu0 0.0
        %1234 = vmatprep.subr.mxu0 0.0
        %1235 = vmatpush2.msra.mxu0 0.0
        %1236 = vmatprep.mubr.f32.mxu0 0.0
        %1237 = vmatmul.mubr.f32.gmra.mxu0 %v1170
        %v1238 = vpop.f32.mrf.mxu0
        %v1239 = vadd.f32 %v1168, %v1238
        %v1240 = vpop.f32.mrf.mxu0
        %1241 = vdwg.mxu0
        %v1242 = vmul.f32 %v1239, 0.5
        %v1243 = vmul.f32 %v1239, 0.70710677
        %v1244 = verf.f32.pop %v1243
        %v1245 = vadd.f32 %v1244, 1.0
        %v1246 = vmul.f32 %v1242, %v1245
        %v1247 = vld [vmem:[%s4] sm:$0xff]
        %v1248 = vld [vmem:[%s4 + $0x8] sm:$0xff]
        %v1249 = vld [vmem:[%s4 + $0x10] sm:$0xff]
        %v1250 = vld [vmem:[%s4 + $0x18] sm:$0xff]
        %v1251 = vld [vmem:[%s4 + $0x20] sm:$0xff]
        %v1252 = vld [vmem:[%s4 + $0x28] sm:$0xff]
        %v1253 = vld [vmem:[%s4 + $0x30] sm:$0xff]
        %v1254 = vld [vmem:[%s4 + $0x38] sm:$0xff]
        %v1255 = vlaneseq
        %v1256 = vshrl.u32 %v1255, 7
        %v1257 = vsub.s32 7, %v1256
        %v1258 = vrot.slane %v268, %v1257
        %vm1259 = vcmask 523264
        %v1261 = vsel %vm1259, %v1246, 0
        %1263 = vmatprep.subr.mxu0 0.0
        %1264 = vmatpush1.msra.mxu0 0.0
        %1265 = vmatprep.subr.mxu0 0.0
        %1266 = vmatpush1.msra.mxu0 0.0
        %1267 = vmatprep.subr.mxu0 0.0
        %1268 = vmatpush1.msra.mxu0 0.0
        %1269 = vmatprep.subr.mxu0 0.0
        %1270 = vmatpush1.msra.mxu0 0.0
        %1271 = vmatprep.subr.mxu0 0.0
        %1272 = vmatpush1.msra.mxu0 0.0
        %1273 = vmatprep.subr.mxu0 0.0
        %1274 = vmatpush1.msra.mxu0 0.0
        %1275 = vmatprep.subr.mxu0 0.0
        %1276 = vmatpush1.msra.mxu0 0.0
        %1277 = vmatprep.subr.mxu0 0.0
        %1278 = vmatpush1.msra.mxu0 0.0
        %1279 = vmatprep.subr.mxu0 0.0
        %1280 = vmatpush1.msra.mxu0 %v1254
        %1281 = vmatprep.subr.mxu0 0.0
        %1282 = vmatpush1.msra.mxu0 %v1253
        %1283 = vmatprep.subr.mxu0 0.0
        %1284 = vmatpush1.msra.mxu0 %v1252
        %1285 = vmatprep.subr.mxu0 0.0
        %1286 = vmatpush1.msra.mxu0 %v1251
        %1287 = vmatprep.subr.mxu0 0.0
        %1288 = vmatpush1.msra.mxu0 %v1250
        %1289 = vmatprep.subr.mxu0 0.0
        %1290 = vmatpush1.msra.mxu0 %v1249
        %1291 = vmatprep.subr.mxu0 0.0
        %1292 = vmatpush1.msra.mxu0 %v1248
        %1293 = vmatprep.subr.mxu0 0.0
        %1294 = vmatpush1.msra.mxu0 %v1247
        %1295 = vmatprep.subr.mxu0 0.0
        %1296 = vmatpush2.msra.mxu0 0.0
        %1297 = vmatprep.subr.mxu0 0.0
        %1298 = vmatpush2.msra.mxu0 0.0
        %1299 = vmatprep.subr.mxu0 0.0
        %1300 = vmatpush2.msra.mxu0 0.0
        %1301 = vmatprep.subr.mxu0 0.0
        %1302 = vmatpush2.msra.mxu0 0.0
        %1303 = vmatprep.subr.mxu0 0.0
        %1304 = vmatpush2.msra.mxu0 0.0
        %1305 = vmatprep.subr.mxu0 0.0
        %1306 = vmatpush2.msra.mxu0 0.0
        %1307 = vmatprep.subr.mxu0 0.0
        %1308 = vmatpush2.msra.mxu0 0.0
        %1309 = vmatprep.subr.mxu0 0.0
        %1310 = vmatpush2.msra.mxu0 0.0
        %1311 = vmatprep.subr.mxu0 0.0
        %1312 = vmatpush2.msra.mxu0 0.0
        %1313 = vmatprep.subr.mxu0 0.0
        %1314 = vmatpush2.msra.mxu0 0.0
        %1315 = vmatprep.subr.mxu0 0.0
        %1316 = vmatpush2.msra.mxu0 0.0
        %1317 = vmatprep.subr.mxu0 0.0
        %1318 = vmatpush2.msra.mxu0 0.0
        %1319 = vmatprep.subr.mxu0 0.0
        %1320 = vmatpush2.msra.mxu0 0.0
        %1321 = vmatprep.subr.mxu0 0.0
        %1322 = vmatpush2.msra.mxu0 0.0
        %1323 = vmatprep.subr.mxu0 0.0
        %1324 = vmatpush2.msra.mxu0 0.0
        %1325 = vmatprep.subr.mxu0 0.0
        %1326 = vmatpush2.msra.mxu0 0.0
        %1327 = vmatprep.mubr.f32.mxu0 0.0
        %1328 = vmatmul.mubr.f32.gmra.mxu0 %v1261
        %v1329 = vpop.f32.mrf.mxu0
        %v1330 = vadd.f32 %v1258, %v1329
        %v1331 = vpop.f32.mrf.mxu0
        %1332 = vdwg.mxu0
        %v1333 = vadd.f32 %v1137, %v1330
        %1334 = vst.msk [vmem:[%s266] sm:$0xff] %vm269, %v1333
        %s1335 = sand.u32 %s162, 1
        %s1336 = scalar_lea.sflag [#allocation4], %s1335
        %s1337 = sand.u32 %s162, 1
        %s1338 = smul.addr %s1337, 8
        %s1339 = scalar_lea.vmem [#allocation5], %s1338
        // Predicated region
        $region49: #{tpu_custom_call.1} parent=43 // pred_check
          %p1340 = pneg %p172
        $region50: #{tpu_custom_call.1} parent=43 // pred_check_branch
          %1342 = sbr.rel (%p1340) target = $region52
        $region51: #{tpu_custom_call.1} parent=43 // pred_region
          %s1344 = ssub.s32 128, 128
          %1345 = vsyncadd %s1336, %s1344
          %s1346 = smul.addr %s23, 128
          %s1347 = scalar_lea.hbm %s6, %s1346
          %s1349 = sshll.u32 %s1339, 4
          %s1350 = int_to_ptr.vmem [resolvable:$true] %s1349
          %1352 = dma.vmem_to_hbm [thread:$0]  %s1350, 128, %s1347, %s1336
        $region52: #{tpu_custom_call.1} parent=43 // pred_fallthru
          _
      $region44: #{tpu_custom_call.1} parent=5 // pred_fallthru
        _
      %p1353 = scmp.le.s32.totalorder 2, %s18
      // Predicated region
      $region53: #{tpu_custom_call.1} parent=5 // pred_check
        %p1354 = pneg %p1353
      $region54: #{tpu_custom_call.1} parent=5 // pred_check_branch
        %1356 = sbr.rel (%p1354) target = $region56
      $region55: #{tpu_custom_call.1} parent=5 // pred_region
        %s1357 = ssub.s32 %s18, 2
        // Predicated region
        $region57: #{tpu_custom_call.1} parent=55 // pred_check
          %p1358 = pneg %p178
        $region58: #{tpu_custom_call.1} parent=55 // pred_check_branch
          %1360 = sbr.rel (%p1358) target = $region60
        $region59: #{tpu_custom_call.1} parent=55 // pred_region
          %s1361 = sand.u32 %s163, 1
          %s1362 = scalar_lea.sflag [#allocation4], %s1361
          %s1363 = sand.u32 %s163, 1
          %s1364 = smul.addr %s1363, 8
          %s1365 = scalar_lea.vmem [#allocation5], %s1364
          %1366 = dma.done %s1362, 128
        $region60: #{tpu_custom_call.1} parent=55 // pred_fallthru
          _
      $region56: #{tpu_custom_call.1} parent=5 // pred_fallthru
        _
    $region6: #{tpu_custom_call.1} parent=1 // loop_footer
      %s22 = sadd.s32 1, %s18
    $region7: #{tpu_custom_call.1} parent=1 // loop_footer_branch
      %17 = sbr.rel target = $region3
    $region8: #{tpu_custom_call.1} parent=1 // loop_exit
      _
    %1367 = vsyncpa [#allocation3], 1
    %s1368 = scalar_lea.sflag [#allocation3], 1
    %1369 = vsyncpa %s1368, 1
    %1370 = vsyncpa [#allocation4], 1
    %s1371 = scalar_lea.sflag [#allocation4], 1
    %1372 = vsyncpa %s1371, 1

</llo_original>
